<compile_context>
chip_gen: v6e
topology: v6e:2x2x1
jax: 0.10.0
libtpu: 0.0.40
codegen_flags: <defaults>
</compile_context>

<pallas_src>
import functools

import jax
import jax.numpy as jnp
from jax import lax
from jax.experimental import pallas as pl
from jax.experimental.pallas import tpu as pltpu


def embed_kernel(ids_ref, table_ref, out_ref, *, scale, pack, vocab):
    """One grid step: embed rows * pack tokens into a lane-dense block.

    ids_ref   : (1, pack, rows) int32 -- ids[0, p, r] is the token written to
                output row r, lane block p of this tile.
    table_ref : (V, D) embedding table, VMEM-resident (same block every step).
    out_ref   : (rows, pack*D) lane-dense output block.
    """
    rows = out_ref.shape[0]
    tbl = table_ref[...].astype(jnp.float32)                     # (V, D)

    pieces = []
    for p in range(pack):                                        # static unroll
        ids_p = ids_ref[0, p, :]                                 # (rows,) int32
        one_hot = (ids_p[:, None] ==
                   lax.broadcasted_iota(jnp.int32, (rows, vocab), 1)
                   ).astype(jnp.float32)                         # (rows, V)
        # Exact row-select: one-hot entries are exactly 0/1; HIGHEST keeps the
        # f32 table values intact through the MXU.
        emb = jnp.dot(one_hot, tbl,
                      preferred_element_type=jnp.float32,
                      precision=lax.Precision.HIGHEST)           # (rows, D)
        pieces.append(emb * scale)

    out_ref[...] = jnp.concatenate(pieces, axis=-1).astype(out_ref.dtype)


def embedding_forward(ids, table, *, scale=True, token_tile=512):
    """ids: (B, S) int -> (B, S, D) float embeddings, optionally * sqrt(D)."""
    B, S = ids.shape
    V, D = table.shape
    itemsize = jnp.dtype(table.dtype).itemsize

    # This kernel keeps the table VMEM-resident; guard against huge tables.
    assert V * D * itemsize <= 8 * 1024 * 1024, (
        "table too large for the VMEM-resident path")

    # Lane packing: how many D-wide tokens fit one 128-lane output row.
    pack = 128 // D if (D <= 128 and 128 % D == 0) else 1
    group = pack * 8                       # tokens per 8-sublane output tile

    N = B * S
    n_groups = -(-N // group)              # ceil
    tile_groups = max(1, min(token_tile // group, n_groups))
    tile = tile_groups * group             # tokens per grid step
    rows = tile // pack                    # output-block sublanes (mult. of 8)
    n_tiles = -(-N // tile)
    N_pad = n_tiles * tile

    # Flatten, clamp (PyTorch raises on OOB ids; we clamp), pad ragged tail.
    ids_flat = jnp.clip(ids.reshape(N).astype(jnp.int32), 0, V - 1)
    if N_pad != N:
        ids_flat = jnp.pad(ids_flat, (0, N_pad - N))
    # [i, r, p] -> [i, p, r]: token i*tile + r*pack + p lands in output row r,
    # lane block p of grid step i (wrapper-side layout plumbing, free).
    ids_arr = ids_flat.reshape(n_tiles, rows, pack).transpose(0, 2, 1)

    scale_val = float(D) ** 0.5 if scale else 1.0
    bytes_accessed = N_pad * 4 + V * D * itemsize + N_pad * D * itemsize

    out_packed = pl.pallas_call(
        functools.partial(embed_kernel, scale=scale_val, pack=pack, vocab=V),
        out_shape=jax.ShapeDtypeStruct((N_pad // pack, pack * D), table.dtype),
        grid_spec=pltpu.PrefetchScalarGridSpec(
            num_scalar_prefetch=0,
            grid=(n_tiles,),
            in_specs=[
                pl.BlockSpec((1, pack, rows), lambda i: (i, 0, 0)),  # ids tile
                pl.BlockSpec((V, D), lambda i: (0, 0)),              # resident table
            ],
            out_specs=pl.BlockSpec((rows, pack * D), lambda i: (i, 0)),
        ),
        compiler_params=pltpu.CompilerParams(
            dimension_semantics=("parallel",)),
        cost_estimate=pl.CostEstimate(flops=2 * N_pad * V * D,
                                      transcendentals=0,
                                      bytes_accessed=bytes_accessed),
    )(ids_arr, table)

    return out_packed.reshape(N_pad, D)[:N].reshape(B, S, D)


if __name__ == "__main__":
    # Module config: voc_len=48, emb_dim=32, zeros_pad=True (PAD_ID=0), scale=True
    VOC_LEN, EMB_DIM, PAD_ID = 48, 32, 0
    B, S = 2, 8

    key = jax.random.PRNGKey(0)
    k_tab, k_ids = jax.random.split(key)

    # Deterministic init; zero the padding row (nn.Embedding(padding_idx=..)).
    table = jax.random.normal(k_tab, (VOC_LEN, EMB_DIM), dtype=jnp.float32)
    table = table.at[PAD_ID].set(0.0)

    ids = jax.random.randint(k_ids, (B, S), 0, VOC_LEN, dtype=jnp.int32)

    out = embedding_forward(ids, table, scale=True)
    out = jax.block_until_ready(out)

    # Pure-JAX reference: lut(x) * emb_dim**0.5
    ref = jnp.take(table, ids, axis=0) * (EMB_DIM ** 0.5)
    assert out.shape == (B, S, EMB_DIM)
    assert jnp.allclose(out, ref, atol=1e-5, rtol=1e-5), "mismatch vs reference"

    print("KERNEL_OK")
</pallas_src>

<mosaic_0001>
module attributes {stable_mosaic.version = 11 : i64} {
  func.func @embed_kernel(%arg0: i32, %arg1: memref<1x4x8xi32, #tpu.memory_space<vmem>>, %arg2: memref<48x32xf32, #tpu.memory_space<vmem>>, %arg3: memref<8x128xf32, #tpu.memory_space<vmem>>) attributes {dimension_semantics = [#tpu.dimension_semantics<parallel>], iteration_bounds = array<i64: 1>, scalar_prefetch = 0 : i64, scratch_operands = 0 : i64, tpu.core_type = #tpu.core_type<tc>, window_params = [{transform_indices = @transform_0, window_bounds = array<i64: 1, 4, 8>}, {pipeline_mode = #tpu.pipeline_mode<synchronous>, transform_indices = @transform_1, window_bounds = array<i64: 48, 32>}, {transform_indices = @transform_2, window_bounds = array<i64: 8, 128>}]} {
    %c0 = arith.constant 0 : index
    %c0_0 = arith.constant 0 : index
    %0 = vector.load %arg2[%c0, %c0_0] : memref<48x32xf32, #tpu.memory_space<vmem>>, vector<48x32xf32>
    %c0_1 = arith.constant 0 : index
    %c0_2 = arith.constant 0 : index
    %c0_3 = arith.constant 0 : index
    %1 = vector.load %arg1[%c0_1, %c0_2, %c0_3] : memref<1x4x8xi32, #tpu.memory_space<vmem>>, vector<1x1x8xi32>
    %2 = vector.shape_cast %1 : vector<1x1x8xi32> to vector<8xi32>
    %3 = vector.shape_cast %2 : vector<8xi32> to vector<8x1xi32>
    %4 = tpu.iota {dimensions = array<i32: 1>} : vector<8x48xi32>
    %5 = vector.broadcast %3 : vector<8x1xi32> to vector<8x48xi32>
    %6 = arith.cmpi eq, %5, %4 : vector<8x48xi32>
    %7 = arith.extui %6 : vector<8x48xi1> to vector<8x48xi32>
    %8 = arith.sitofp %7 : vector<8x48xi32> to vector<8x48xf32>
    %cst = arith.constant dense<0.000000e+00> : vector<8x32xf32>
    %9 = tpu.matmul %8, %0, %cst {dimension_numbers = #tpu.dot_dimension_numbers<[1], [0], [0], [1], [0, 0, 1, 1], [], []>, precision = #tpu.contract_precision<fp32>} : vector<8x48xf32>, vector<48x32xf32>, vector<8x32xf32> -> vector<8x32xf32>
    %cst_4 = arith.constant 5.65685415 : f32
    %10 = vector.broadcast %cst_4 : f32 to vector<8x32xf32>
    %11 = arith.mulf %9, %10 : vector<8x32xf32>
    %c0_5 = arith.constant 0 : index
    %c1 = arith.constant 1 : index
    %c0_6 = arith.constant 0 : index
    %12 = vector.load %arg1[%c0_5, %c1, %c0_6] : memref<1x4x8xi32, #tpu.memory_space<vmem>>, vector<1x1x8xi32>
    %13 = vector.shape_cast %12 : vector<1x1x8xi32> to vector<8xi32>
    %14 = vector.shape_cast %13 : vector<8xi32> to vector<8x1xi32>
    %15 = tpu.iota {dimensions = array<i32: 1>} : vector<8x48xi32>
    %16 = vector.broadcast %14 : vector<8x1xi32> to vector<8x48xi32>
    %17 = arith.cmpi eq, %16, %15 : vector<8x48xi32>
    %18 = arith.extui %17 : vector<8x48xi1> to vector<8x48xi32>
    %19 = arith.sitofp %18 : vector<8x48xi32> to vector<8x48xf32>
    %cst_7 = arith.constant dense<0.000000e+00> : vector<8x32xf32>
    %20 = tpu.matmul %19, %0, %cst_7 {dimension_numbers = #tpu.dot_dimension_numbers<[1], [0], [0], [1], [0, 0, 1, 1], [], []>, precision = #tpu.contract_precision<fp32>} : vector<8x48xf32>, vector<48x32xf32>, vector<8x32xf32> -> vector<8x32xf32>
    %cst_8 = arith.constant 5.65685415 : f32
    %21 = vector.broadcast %cst_8 : f32 to vector<8x32xf32>
    %22 = arith.mulf %20, %21 : vector<8x32xf32>
    %c0_9 = arith.constant 0 : index
    %c2 = arith.constant 2 : index
    %c0_10 = arith.constant 0 : index
    %23 = vector.load %arg1[%c0_9, %c2, %c0_10] : memref<1x4x8xi32, #tpu.memory_space<vmem>>, vector<1x1x8xi32>
    %24 = vector.shape_cast %23 : vector<1x1x8xi32> to vector<8xi32>
    %25 = vector.shape_cast %24 : vector<8xi32> to vector<8x1xi32>
    %26 = tpu.iota {dimensions = array<i32: 1>} : vector<8x48xi32>
    %27 = vector.broadcast %25 : vector<8x1xi32> to vector<8x48xi32>
    %28 = arith.cmpi eq, %27, %26 : vector<8x48xi32>
    %29 = arith.extui %28 : vector<8x48xi1> to vector<8x48xi32>
    %30 = arith.sitofp %29 : vector<8x48xi32> to vector<8x48xf32>
    %cst_11 = arith.constant dense<0.000000e+00> : vector<8x32xf32>
    %31 = tpu.matmul %30, %0, %cst_11 {dimension_numbers = #tpu.dot_dimension_numbers<[1], [0], [0], [1], [0, 0, 1, 1], [], []>, precision = #tpu.contract_precision<fp32>} : vector<8x48xf32>, vector<48x32xf32>, vector<8x32xf32> -> vector<8x32xf32>
    %cst_12 = arith.constant 5.65685415 : f32
    %32 = vector.broadcast %cst_12 : f32 to vector<8x32xf32>
    %33 = arith.mulf %31, %32 : vector<8x32xf32>
    %c0_13 = arith.constant 0 : index
    %c3 = arith.constant 3 : index
    %c0_14 = arith.constant 0 : index
    %34 = vector.load %arg1[%c0_13, %c3, %c0_14] : memref<1x4x8xi32, #tpu.memory_space<vmem>>, vector<1x1x8xi32>
    %35 = vector.shape_cast %34 : vector<1x1x8xi32> to vector<8xi32>
    %36 = vector.shape_cast %35 : vector<8xi32> to vector<8x1xi32>
    %37 = tpu.iota {dimensions = array<i32: 1>} : vector<8x48xi32>
    %38 = vector.broadcast %36 : vector<8x1xi32> to vector<8x48xi32>
    %39 = arith.cmpi eq, %38, %37 : vector<8x48xi32>
    %40 = arith.extui %39 : vector<8x48xi1> to vector<8x48xi32>
    %41 = arith.sitofp %40 : vector<8x48xi32> to vector<8x48xf32>
    %cst_15 = arith.constant dense<0.000000e+00> : vector<8x32xf32>
    %42 = tpu.matmul %41, %0, %cst_15 {dimension_numbers = #tpu.dot_dimension_numbers<[1], [0], [0], [1], [0, 0, 1, 1], [], []>, precision = #tpu.contract_precision<fp32>} : vector<8x48xf32>, vector<48x32xf32>, vector<8x32xf32> -> vector<8x32xf32>
    %cst_16 = arith.constant 5.65685415 : f32
    %43 = vector.broadcast %cst_16 : f32 to vector<8x32xf32>
    %44 = arith.mulf %42, %43 : vector<8x32xf32>
    %45 = tpu.concatenate %11, %22, %33, %44 in 1 : vector<8x32xf32>, vector<8x32xf32>, vector<8x32xf32>, vector<8x32xf32> -> vector<8x128xf32>
    %c0_17 = arith.constant 0 : index
    %c0_18 = arith.constant 0 : index
    %46 = vector.load %arg3[%c0_17, %c0_18] : memref<8x128xf32, #tpu.memory_space<vmem>>, vector<8x128xf32>
    tpu.vector_store %arg3[%c0_17, %c0_18], %45 {strides = array<i32>} : memref<8x128xf32, #tpu.memory_space<vmem>>, vector<8x128xf32>,
    return
  }
  func.func @transform_0(%arg0: i32) -> (i32, i32, i32) {
    %c0_i32 = arith.constant 0 : i32
    %c0_i32_0 = arith.constant 0 : i32
    %c0_i32_1 = arith.constant 0 : i32
    return %arg0, %c0_i32, %c0_i32_0 : i32, i32, i32
  }
  func.func @transform_1(%arg0: i32) -> (i32, i32) {
    %c0_i32 = arith.constant 0 : i32
    %c0_i32_0 = arith.constant 0 : i32
    %c0_i32_1 = arith.constant 0 : i32
    return %c0_i32, %c0_i32_0 : i32, i32
  }
  func.func @transform_2(%arg0: i32) -> (i32, i32) {
    %c0_i32 = arith.constant 0 : i32
    %c0_i32_0 = arith.constant 0 : i32
    return %arg0, %c0_i32 : i32, i32
  }
}

</mosaic_0001>

<llo_original>
// kernel: tpu_custom_call.1
$region0: #{tpu_custom_call.1}
  #allocation0 [shape = 'u32[]', space=smem, size = 0x4, offset = 0x4, fixed_abs, tag = 'smem constant byte address 0x4 - core index']
  #allocation1 [shape = 'u32[144,128]{1,0:T(1,128)}', space=vmem, size = 0x12000, scoped, tag = 'internal scratch']
  %s0 = inlined_call_operand.vmem [shape: s32[1,4,8], index: 0, kind: input, shape index: {}]
  %s1 = inlined_call_operand.vmem [shape: f32[48,32], index: 1, kind: input, shape index: {}]
  %s2 = inlined_call_operand.hbm [shape: f32[8,128], index: 2, kind: output, shape index: {}]
  %s3 = sld [smem:[#allocation0]]
  $region18: #{tpu_custom_call.1} parent=0
    _
  %s5 = ssub.s32 1, %s3
  %s6 = scalar_select 0, %s5, %s3
  $region1: #{tpu_custom_call.1} parent=0
    #allocation2 [shape = 'u8[4096]{0}', space=vmem, size = 0x1000, scoped, tag = 'output window, operand 0, single buffered']
    #allocation3 [shape = 's32[1]{0}', space=sflag, size = 0x4, scoped, tag = 'scoped memory for tpu_custom_call.1']
    %7 = vsyncpa [#allocation3], 0
    // Predicated region
    $region2: #{tpu_custom_call.1} parent=1 // pred_check
      _
    $region3: #{tpu_custom_call.1} parent=1 // pred_check_branch
      %9 = sbr.rel (0) target = $region5
    $region4: #{tpu_custom_call.1} parent=1 // pred_region
      _
    $region5: #{tpu_custom_call.1} parent=1 // pred_fallthru
      _
    // Predicated region
    $region6: #{tpu_custom_call.1} parent=1 // pred_check
      _
    $region7: #{tpu_custom_call.1} parent=1 // pred_check_branch
      %11 = sbr.rel (0) target = $region9
    $region8: #{tpu_custom_call.1} parent=1 // pred_region
      _
    $region9: #{tpu_custom_call.1} parent=1 // pred_fallthru
      _
    %v12 = vld [vmem:[%s1] sm:$0xff]
    %v13 = vld [vmem:[%s1 + $0x8] sm:$0xff]
    %v14 = vld [vmem:[%s1 + $0x10] sm:$0xff]
    %v15 = vld [vmem:[%s1 + $0x18] sm:$0xff]
    %v16 = vld [vmem:[%s1 + $0x20] sm:$0xff]
    %v17 = vld [vmem:[%s1 + $0x28] sm:$0xff]
    %v18 = vld [vmem:[%s0] sm:$0x1]
    %v19 = vlaneseq
    %v20 = vshrl.u32 %v19, 7
    %v21 = vsub.s32 0, %v20
    %v22 = vrot.slane %v18, %v21
    %24 = vbcast.lane.b32.xlu0 %v22, 256
    %v25 = vpop.permute.xlu0 %24
    %v26 = vlaneseq
    %v27 = vand.u32 %v26, 127
    %vm28 = vcmp.eq.s32.totalorder %v25, %v27
    %v29 = vsel %vm28, 1, 0
    %v30 = vcvt.s32.f32 %v29
    %vm31 = vcmask 392192
    %v33 = vsel %vm31, %v30, 0
    %35 = vmatprep.subr.mxu0 0.0
    %36 = vmatpush1.msra.mxu0 0.0
    %37 = vmatprep.subr.mxu0 0.0
    %38 = vmatpush1.msra.mxu0 0.0
    %39 = vmatprep.subr.mxu0 0.0
    %40 = vmatpush1.msra.mxu0 0.0
    %41 = vmatprep.subr.mxu0 0.0
    %42 = vmatpush1.msra.mxu0 0.0
    %43 = vmatprep.subr.mxu0 0.0
    %44 = vmatpush1.msra.mxu0 0.0
    %45 = vmatprep.subr.mxu0 0.0
    %46 = vmatpush1.msra.mxu0 0.0
    %47 = vmatprep.subr.mxu0 0.0
    %48 = vmatpush1.msra.mxu0 0.0
    %49 = vmatprep.subr.mxu0 0.0
    %50 = vmatpush1.msra.mxu0 0.0
    %51 = vmatprep.subr.mxu0 0.0
    %52 = vmatpush1.msra.mxu0 0.0
    %53 = vmatprep.subr.mxu0 0.0
    %54 = vmatpush1.msra.mxu0 0.0
    %55 = vmatprep.subr.mxu0 0.0
    %v56 = vand.u32 %v17, 4294901760
    %57 = vmatpush1.msra.mxu0 %v56
    %58 = vmatprep.subr.mxu0 0.0
    %v59 = vand.u32 %v16, 4294901760
    %60 = vmatpush1.msra.mxu0 %v59
    %61 = vmatprep.subr.mxu0 0.0
    %v62 = vand.u32 %v15, 4294901760
    %63 = vmatpush1.msra.mxu0 %v62
    %64 = vmatprep.subr.mxu0 0.0
    %v65 = vand.u32 %v14, 4294901760
    %66 = vmatpush1.msra.mxu0 %v65
    %67 = vmatprep.subr.mxu0 0.0
    %v68 = vand.u32 %v13, 4294901760
    %69 = vmatpush1.msra.mxu0 %v68
    %70 = vmatprep.subr.mxu0 0.0
    %v71 = vand.u32 %v12, 4294901760
    %72 = vmatpush1.msra.mxu0 %v71
    %73 = vmatprep.subr.mxu0 0.0
    %74 = vmatpush2.msra.mxu0 0.0
    %75 = vmatprep.subr.mxu0 0.0
    %76 = vmatpush2.msra.mxu0 0.0
    %77 = vmatprep.subr.mxu0 0.0
    %78 = vmatpush2.msra.mxu0 0.0
    %79 = vmatprep.subr.mxu0 0.0
    %80 = vmatpush2.msra.mxu0 0.0
    %81 = vmatprep.subr.mxu0 0.0
    %82 = vmatpush2.msra.mxu0 0.0
    %83 = vmatprep.subr.mxu0 0.0
    %84 = vmatpush2.msra.mxu0 0.0
    %85 = vmatprep.subr.mxu0 0.0
    %86 = vmatpush2.msra.mxu0 0.0
    %87 = vmatprep.subr.mxu0 0.0
    %88 = vmatpush2.msra.mxu0 0.0
    %89 = vmatprep.subr.mxu0 0.0
    %90 = vmatpush2.msra.mxu0 0.0
    %91 = vmatprep.subr.mxu0 0.0
    %92 = vmatpush2.msra.mxu0 0.0
    %93 = vmatprep.subr.mxu0 0.0
    %94 = vmatpush2.msra.mxu0 0.0
    %95 = vmatprep.subr.mxu0 0.0
    %96 = vmatpush2.msra.mxu0 0.0
    %97 = vmatprep.subr.mxu0 0.0
    %98 = vmatpush2.msra.mxu0 0.0
    %99 = vmatprep.subr.mxu0 0.0
    %100 = vmatpush2.msra.mxu0 0.0
    %101 = vmatprep.subr.mxu0 0.0
    %102 = vmatpush2.msra.mxu0 0.0
    %103 = vmatprep.subr.mxu0 0.0
    %104 = vmatpush2.msra.mxu0 0.0
    %105 = vmatprep.mubr.f32.mxu0 0.0
    %v106 = vand.u32 %v33, 4294901760
    %v107 = vsub.f32 %v33, %v106
    %v108 = vand.u32 %v107, 4294901760
    %v109 = vsub.f32 %v107, %v108
    %v110 = vand.u32 %v109, 4294901760
    %111 = vmatmul.mubr.f32.gmra.mxu0 %v110
    %v112 = vpop.f32.mrf.mxu0
    %v113 = vadd.f32 0.0, %v112
    %v114 = vpop.f32.mrf.mxu0
    %115 = vdwg.mxu0
    %116 = vmatprep.subr.mxu0 0.0
    %117 = vmatpush1.msra.mxu0 0.0
    %118 = vmatprep.subr.mxu0 0.0
    %119 = vmatpush1.msra.mxu0 0.0
    %120 = vmatprep.subr.mxu0 0.0
    %121 = vmatpush1.msra.mxu0 0.0
    %122 = vmatprep.subr.mxu0 0.0
    %123 = vmatpush1.msra.mxu0 0.0
    %124 = vmatprep.subr.mxu0 0.0
    %125 = vmatpush1.msra.mxu0 0.0
    %126 = vmatprep.subr.mxu0 0.0
    %127 = vmatpush1.msra.mxu0 0.0
    %128 = vmatprep.subr.mxu0 0.0
    %129 = vmatpush1.msra.mxu0 0.0
    %130 = vmatprep.subr.mxu0 0.0
    %131 = vmatpush1.msra.mxu0 0.0
    %132 = vmatprep.subr.mxu0 0.0
    %133 = vmatpush1.msra.mxu0 0.0
    %134 = vmatprep.subr.mxu0 0.0
    %135 = vmatpush1.msra.mxu0 0.0
    %136 = vmatprep.subr.mxu0 0.0
    %v137 = vand.u32 %v17, 4294901760
    %v138 = vsub.f32 %v17, %v137
    %v139 = vand.u32 %v138, 4294901760
    %v140 = vsub.f32 %v138, %v139
    %v141 = vand.u32 %v140, 4294901760
    %142 = vmatpush1.msra.mxu0 %v141
    %143 = vmatprep.subr.mxu0 0.0
    %v144 = vand.u32 %v16, 4294901760
    %v145 = vsub.f32 %v16, %v144
    %v146 = vand.u32 %v145, 4294901760
    %v147 = vsub.f32 %v145, %v146
    %v148 = vand.u32 %v147, 4294901760
    %149 = vmatpush1.msra.mxu0 %v148
    %150 = vmatprep.subr.mxu0 0.0
    %v151 = vand.u32 %v15, 4294901760
    %v152 = vsub.f32 %v15, %v151
    %v153 = vand.u32 %v152, 4294901760
    %v154 = vsub.f32 %v152, %v153
    %v155 = vand.u32 %v154, 4294901760
    %156 = vmatpush1.msra.mxu0 %v155
    %157 = vmatprep.subr.mxu0 0.0
    %v158 = vand.u32 %v14, 4294901760
    %v159 = vsub.f32 %v14, %v158
    %v160 = vand.u32 %v159, 4294901760
    %v161 = vsub.f32 %v159, %v160
    %v162 = vand.u32 %v161, 4294901760
    %163 = vmatpush1.msra.mxu0 %v162
    %164 = vmatprep.subr.mxu0 0.0
    %v165 = vand.u32 %v13, 4294901760
    %v166 = vsub.f32 %v13, %v165
    %v167 = vand.u32 %v166, 4294901760
    %v168 = vsub.f32 %v166, %v167
    %v169 = vand.u32 %v168, 4294901760
    %170 = vmatpush1.msra.mxu0 %v169
    %171 = vmatprep.subr.mxu0 0.0
    %v172 = vand.u32 %v12, 4294901760
    %v173 = vsub.f32 %v12, %v172
    %v174 = vand.u32 %v173, 4294901760
    %v175 = vsub.f32 %v173, %v174
    %v176 = vand.u32 %v175, 4294901760
    %177 = vmatpush1.msra.mxu0 %v176
    %178 = vmatprep.subr.mxu0 0.0
    %179 = vmatpush2.msra.mxu0 0.0
    %180 = vmatprep.subr.mxu0 0.0
    %181 = vmatpush2.msra.mxu0 0.0
    %182 = vmatprep.subr.mxu0 0.0
    %183 = vmatpush2.msra.mxu0 0.0
    %184 = vmatprep.subr.mxu0 0.0
    %185 = vmatpush2.msra.mxu0 0.0
    %186 = vmatprep.subr.mxu0 0.0
    %187 = vmatpush2.msra.mxu0 0.0
    %188 = vmatprep.subr.mxu0 0.0
    %189 = vmatpush2.msra.mxu0 0.0
    %190 = vmatprep.subr.mxu0 0.0
    %191 = vmatpush2.msra.mxu0 0.0
    %192 = vmatprep.subr.mxu0 0.0
    %193 = vmatpush2.msra.mxu0 0.0
    %194 = vmatprep.subr.mxu0 0.0
    %195 = vmatpush2.msra.mxu0 0.0
    %196 = vmatprep.subr.mxu0 0.0
    %197 = vmatpush2.msra.mxu0 0.0
    %198 = vmatprep.subr.mxu0 0.0
    %199 = vmatpush2.msra.mxu0 0.0
    %200 = vmatprep.subr.mxu0 0.0
    %201 = vmatpush2.msra.mxu0 0.0
    %202 = vmatprep.subr.mxu0 0.0
    %203 = vmatpush2.msra.mxu0 0.0
    %204 = vmatprep.subr.mxu0 0.0
    %205 = vmatpush2.msra.mxu0 0.0
    %206 = vmatprep.subr.mxu0 0.0
    %207 = vmatpush2.msra.mxu0 0.0
    %208 = vmatprep.subr.mxu0 0.0
    %209 = vmatpush2.msra.mxu0 0.0
    %210 = vmatprep.mubr.f32.mxu0 0.0
    %v211 = vand.u32 %v33, 4294901760
    %212 = vmatmul.mubr.f32.gmra.mxu0 %v211
    %v213 = vpop.f32.mrf.mxu0
    %v214 = vadd.f32 %v113, %v213
    %v215 = vpop.f32.mrf.mxu0
    %216 = vdwg.mxu0
    %217 = vmatprep.subr.mxu0 0.0
    %218 = vmatpush1.msra.mxu0 0.0
    %219 = vmatprep.subr.mxu0 0.0
    %220 = vmatpush1.msra.mxu0 0.0
    %221 = vmatprep.subr.mxu0 0.0
    %222 = vmatpush1.msra.mxu0 0.0
    %223 = vmatprep.subr.mxu0 0.0
    %224 = vmatpush1.msra.mxu0 0.0
    %225 = vmatprep.subr.mxu0 0.0
    %226 = vmatpush1.msra.mxu0 0.0
    %227 = vmatprep.subr.mxu0 0.0
    %228 = vmatpush1.msra.mxu0 0.0
    %229 = vmatprep.subr.mxu0 0.0
    %230 = vmatpush1.msra.mxu0 0.0
    %231 = vmatprep.subr.mxu0 0.0
    %232 = vmatpush1.msra.mxu0 0.0
    %233 = vmatprep.subr.mxu0 0.0
    %234 = vmatpush1.msra.mxu0 0.0
    %235 = vmatprep.subr.mxu0 0.0
    %236 = vmatpush1.msra.mxu0 0.0
    %237 = vmatprep.subr.mxu0 0.0
    %v238 = vand.u32 %v17, 4294901760
    %v239 = vsub.f32 %v17, %v238
    %240 = vmatpush1.msra.mxu0 %v239
    %241 = vmatprep.subr.mxu0 0.0
    %v242 = vand.u32 %v16, 4294901760
    %v243 = vsub.f32 %v16, %v242
    %244 = vmatpush1.msra.mxu0 %v243
    %245 = vmatprep.subr.mxu0 0.0
    %v246 = vand.u32 %v15, 4294901760
    %v247 = vsub.f32 %v15, %v246
    %248 = vmatpush1.msra.mxu0 %v247
    %249 = vmatprep.subr.mxu0 0.0
    %v250 = vand.u32 %v14, 4294901760
    %v251 = vsub.f32 %v14, %v250
    %252 = vmatpush1.msra.mxu0 %v251
    %253 = vmatprep.subr.mxu0 0.0
    %v254 = vand.u32 %v13, 4294901760
    %v255 = vsub.f32 %v13, %v254
    %256 = vmatpush1.msra.mxu0 %v255
    %257 = vmatprep.subr.mxu0 0.0
    %v258 = vand.u32 %v12, 4294901760
    %v259 = vsub.f32 %v12, %v258
    %260 = vmatpush1.msra.mxu0 %v259
    %261 = vmatprep.subr.mxu0 0.0
    %262 = vmatpush2.msra.mxu0 0.0
    %263 = vmatprep.subr.mxu0 0.0
    %264 = vmatpush2.msra.mxu0 0.0
    %265 = vmatprep.subr.mxu0 0.0
    %266 = vmatpush2.msra.mxu0 0.0
    %267 = vmatprep.subr.mxu0 0.0
    %268 = vmatpush2.msra.mxu0 0.0
    %269 = vmatprep.subr.mxu0 0.0
    %270 = vmatpush2.msra.mxu0 0.0
    %271 = vmatprep.subr.mxu0 0.0
    %272 = vmatpush2.msra.mxu0 0.0
    %273 = vmatprep.subr.mxu0 0.0
    %274 = vmatpush2.msra.mxu0 0.0
    %275 = vmatprep.subr.mxu0 0.0
    %276 = vmatpush2.msra.mxu0 0.0
    %277 = vmatprep.subr.mxu0 0.0
    %278 = vmatpush2.msra.mxu0 0.0
    %279 = vmatprep.subr.mxu0 0.0
    %280 = vmatpush2.msra.mxu0 0.0
    %281 = vmatprep.subr.mxu0 0.0
    %282 = vmatpush2.msra.mxu0 0.0
    %283 = vmatprep.subr.mxu0 0.0
    %284 = vmatpush2.msra.mxu0 0.0
    %285 = vmatprep.subr.mxu0 0.0
    %286 = vmatpush2.msra.mxu0 0.0
    %287 = vmatprep.subr.mxu0 0.0
    %288 = vmatpush2.msra.mxu0 0.0
    %289 = vmatprep.subr.mxu0 0.0
    %290 = vmatpush2.msra.mxu0 0.0
    %291 = vmatprep.subr.mxu0 0.0
    %292 = vmatpush2.msra.mxu0 0.0
    %293 = vmatprep.mubr.f32.mxu0 0.0
    %v294 = vand.u32 %v33, 4294901760
    %v295 = vsub.f32 %v33, %v294
    %296 = vmatmul.mubr.f32.gmra.mxu0 %v295
    %v297 = vpop.f32.mrf.mxu0
    %v298 = vadd.f32 %v214, %v297
    %v299 = vpop.f32.mrf.mxu0
    %300 = vdwg.mxu0
    %301 = vmatprep.subr.mxu0 0.0
    %302 = vmatpush1.msra.mxu0 0.0
    %303 = vmatprep.subr.mxu0 0.0
    %304 = vmatpush1.msra.mxu0 0.0
    %305 = vmatprep.subr.mxu0 0.0
    %306 = vmatpush1.msra.mxu0 0.0
    %307 = vmatprep.subr.mxu0 0.0
    %308 = vmatpush1.msra.mxu0 0.0
    %309 = vmatprep.subr.mxu0 0.0
    %310 = vmatpush1.msra.mxu0 0.0
    %311 = vmatprep.subr.mxu0 0.0
    %312 = vmatpush1.msra.mxu0 0.0
    %313 = vmatprep.subr.mxu0 0.0
    %314 = vmatpush1.msra.mxu0 0.0
    %315 = vmatprep.subr.mxu0 0.0
    %316 = vmatpush1.msra.mxu0 0.0
    %317 = vmatprep.subr.mxu0 0.0
    %318 = vmatpush1.msra.mxu0 0.0
    %319 = vmatprep.subr.mxu0 0.0
    %320 = vmatpush1.msra.mxu0 0.0
    %321 = vmatprep.subr.mxu0 0.0
    %v322 = vand.u32 %v17, 4294901760
    %323 = vmatpush1.msra.mxu0 %v322
    %324 = vmatprep.subr.mxu0 0.0
    %v325 = vand.u32 %v16, 4294901760
    %326 = vmatpush1.msra.mxu0 %v325
    %327 = vmatprep.subr.mxu0 0.0
    %v328 = vand.u32 %v15, 4294901760
    %329 = vmatpush1.msra.mxu0 %v328
    %330 = vmatprep.subr.mxu0 0.0
    %v331 = vand.u32 %v14, 4294901760
    %332 = vmatpush1.msra.mxu0 %v331
    %333 = vmatprep.subr.mxu0 0.0
    %v334 = vand.u32 %v13, 4294901760
    %335 = vmatpush1.msra.mxu0 %v334
    %336 = vmatprep.subr.mxu0 0.0
    %v337 = vand.u32 %v12, 4294901760
    %338 = vmatpush1.msra.mxu0 %v337
    %339 = vmatprep.subr.mxu0 0.0
    %340 = vmatpush2.msra.mxu0 0.0
    %341 = vmatprep.subr.mxu0 0.0
    %342 = vmatpush2.msra.mxu0 0.0
    %343 = vmatprep.subr.mxu0 0.0
    %344 = vmatpush2.msra.mxu0 0.0
    %345 = vmatprep.subr.mxu0 0.0
    %346 = vmatpush2.msra.mxu0 0.0
    %347 = vmatprep.subr.mxu0 0.0
    %348 = vmatpush2.msra.mxu0 0.0
    %349 = vmatprep.subr.mxu0 0.0
    %350 = vmatpush2.msra.mxu0 0.0
    %351 = vmatprep.subr.mxu0 0.0
    %352 = vmatpush2.msra.mxu0 0.0
    %353 = vmatprep.subr.mxu0 0.0
    %354 = vmatpush2.msra.mxu0 0.0
    %355 = vmatprep.subr.mxu0 0.0
    %356 = vmatpush2.msra.mxu0 0.0
    %357 = vmatprep.subr.mxu0 0.0
    %358 = vmatpush2.msra.mxu0 0.0
    %359 = vmatprep.subr.mxu0 0.0
    %360 = vmatpush2.msra.mxu0 0.0
    %361 = vmatprep.subr.mxu0 0.0
    %362 = vmatpush2.msra.mxu0 0.0
    %363 = vmatprep.subr.mxu0 0.0
    %364 = vmatpush2.msra.mxu0 0.0
    %365 = vmatprep.subr.mxu0 0.0
    %366 = vmatpush2.msra.mxu0 0.0
    %367 = vmatprep.subr.mxu0 0.0
    %368 = vmatpush2.msra.mxu0 0.0
    %369 = vmatprep.subr.mxu0 0.0
    %370 = vmatpush2.msra.mxu0 0.0
    %371 = vmatprep.mubr.f32.mxu0 0.0
    %v372 = vand.u32 %v33, 4294901760
    %v373 = vsub.f32 %v33, %v372
    %v374 = vand.u32 %v373, 4294901760
    %375 = vmatmul.mubr.f32.gmra.mxu0 %v374
    %v376 = vpop.f32.mrf.mxu0
    %v377 = vadd.f32 %v298, %v376
    %v378 = vpop.f32.mrf.mxu0
    %379 = vdwg.mxu0
    %380 = vmatprep.subr.mxu0 0.0
    %381 = vmatpush1.msra.mxu0 0.0
    %382 = vmatprep.subr.mxu0 0.0
    %383 = vmatpush1.msra.mxu0 0.0
    %384 = vmatprep.subr.mxu0 0.0
    %385 = vmatpush1.msra.mxu0 0.0
    %386 = vmatprep.subr.mxu0 0.0
    %387 = vmatpush1.msra.mxu0 0.0
    %388 = vmatprep.subr.mxu0 0.0
    %389 = vmatpush1.msra.mxu0 0.0
    %390 = vmatprep.subr.mxu0 0.0
    %391 = vmatpush1.msra.mxu0 0.0
    %392 = vmatprep.subr.mxu0 0.0
    %393 = vmatpush1.msra.mxu0 0.0
    %394 = vmatprep.subr.mxu0 0.0
    %395 = vmatpush1.msra.mxu0 0.0
    %396 = vmatprep.subr.mxu0 0.0
    %397 = vmatpush1.msra.mxu0 0.0
    %398 = vmatprep.subr.mxu0 0.0
    %399 = vmatpush1.msra.mxu0 0.0
    %400 = vmatprep.subr.mxu0 0.0
    %v401 = vand.u32 %v17, 4294901760
    %v402 = vsub.f32 %v17, %v401
    %v403 = vand.u32 %v402, 4294901760
    %404 = vmatpush1.msra.mxu0 %v403
    %405 = vmatprep.subr.mxu0 0.0
    %v406 = vand.u32 %v16, 4294901760
    %v407 = vsub.f32 %v16, %v406
    %v408 = vand.u32 %v407, 4294901760
    %409 = vmatpush1.msra.mxu0 %v408
    %410 = vmatprep.subr.mxu0 0.0
    %v411 = vand.u32 %v15, 4294901760
    %v412 = vsub.f32 %v15, %v411
    %v413 = vand.u32 %v412, 4294901760
    %414 = vmatpush1.msra.mxu0 %v413
    %415 = vmatprep.subr.mxu0 0.0
    %v416 = vand.u32 %v14, 4294901760
    %v417 = vsub.f32 %v14, %v416
    %v418 = vand.u32 %v417, 4294901760
    %419 = vmatpush1.msra.mxu0 %v418
    %420 = vmatprep.subr.mxu0 0.0
    %v421 = vand.u32 %v13, 4294901760
    %v422 = vsub.f32 %v13, %v421
    %v423 = vand.u32 %v422, 4294901760
    %424 = vmatpush1.msra.mxu0 %v423
    %425 = vmatprep.subr.mxu0 0.0
    %v426 = vand.u32 %v12, 4294901760
    %v427 = vsub.f32 %v12, %v426
    %v428 = vand.u32 %v427, 4294901760
    %429 = vmatpush1.msra.mxu0 %v428
    %430 = vmatprep.subr.mxu0 0.0
    %431 = vmatpush2.msra.mxu0 0.0
    %432 = vmatprep.subr.mxu0 0.0
    %433 = vmatpush2.msra.mxu0 0.0
    %434 = vmatprep.subr.mxu0 0.0
    %435 = vmatpush2.msra.mxu0 0.0
    %436 = vmatprep.subr.mxu0 0.0
    %437 = vmatpush2.msra.mxu0 0.0
    %438 = vmatprep.subr.mxu0 0.0
    %439 = vmatpush2.msra.mxu0 0.0
    %440 = vmatprep.subr.mxu0 0.0
    %441 = vmatpush2.msra.mxu0 0.0
    %442 = vmatprep.subr.mxu0 0.0
    %443 = vmatpush2.msra.mxu0 0.0
    %444 = vmatprep.subr.mxu0 0.0
    %445 = vmatpush2.msra.mxu0 0.0
    %446 = vmatprep.subr.mxu0 0.0
    %447 = vmatpush2.msra.mxu0 0.0
    %448 = vmatprep.subr.mxu0 0.0
    %449 = vmatpush2.msra.mxu0 0.0
    %450 = vmatprep.subr.mxu0 0.0
    %451 = vmatpush2.msra.mxu0 0.0
    %452 = vmatprep.subr.mxu0 0.0
    %453 = vmatpush2.msra.mxu0 0.0
    %454 = vmatprep.subr.mxu0 0.0
    %455 = vmatpush2.msra.mxu0 0.0
    %456 = vmatprep.subr.mxu0 0.0
    %457 = vmatpush2.msra.mxu0 0.0
    %458 = vmatprep.subr.mxu0 0.0
    %459 = vmatpush2.msra.mxu0 0.0
    %460 = vmatprep.subr.mxu0 0.0
    %461 = vmatpush2.msra.mxu0 0.0
    %462 = vmatprep.mubr.f32.mxu0 0.0
    %v463 = vand.u32 %v33, 4294901760
    %464 = vmatmul.mubr.f32.gmra.mxu0 %v463
    %v465 = vpop.f32.mrf.mxu0
    %v466 = vadd.f32 %v377, %v465
    %v467 = vpop.f32.mrf.mxu0
    %468 = vdwg.mxu0
    %469 = vmatprep.subr.mxu0 0.0
    %470 = vmatpush1.msra.mxu0 0.0
    %471 = vmatprep.subr.mxu0 0.0
    %472 = vmatpush1.msra.mxu0 0.0
    %473 = vmatprep.subr.mxu0 0.0
    %474 = vmatpush1.msra.mxu0 0.0
    %475 = vmatprep.subr.mxu0 0.0
    %476 = vmatpush1.msra.mxu0 0.0
    %477 = vmatprep.subr.mxu0 0.0
    %478 = vmatpush1.msra.mxu0 0.0
    %479 = vmatprep.subr.mxu0 0.0
    %480 = vmatpush1.msra.mxu0 0.0
    %481 = vmatprep.subr.mxu0 0.0
    %482 = vmatpush1.msra.mxu0 0.0
    %483 = vmatprep.subr.mxu0 0.0
    %484 = vmatpush1.msra.mxu0 0.0
    %485 = vmatprep.subr.mxu0 0.0
    %486 = vmatpush1.msra.mxu0 0.0
    %487 = vmatprep.subr.mxu0 0.0
    %488 = vmatpush1.msra.mxu0 0.0
    %489 = vmatprep.subr.mxu0 0.0
    %v490 = vand.u32 %v17, 4294901760
    %491 = vmatpush1.msra.mxu0 %v490
    %492 = vmatprep.subr.mxu0 0.0
    %v493 = vand.u32 %v16, 4294901760
    %494 = vmatpush1.msra.mxu0 %v493
    %495 = vmatprep.subr.mxu0 0.0
    %v496 = vand.u32 %v15, 4294901760
    %497 = vmatpush1.msra.mxu0 %v496
    %498 = vmatprep.subr.mxu0 0.0
    %v499 = vand.u32 %v14, 4294901760
    %500 = vmatpush1.msra.mxu0 %v499
    %501 = vmatprep.subr.mxu0 0.0
    %v502 = vand.u32 %v13, 4294901760
    %503 = vmatpush1.msra.mxu0 %v502
    %504 = vmatprep.subr.mxu0 0.0
    %v505 = vand.u32 %v12, 4294901760
    %506 = vmatpush1.msra.mxu0 %v505
    %507 = vmatprep.subr.mxu0 0.0
    %508 = vmatpush2.msra.mxu0 0.0
    %509 = vmatprep.subr.mxu0 0.0
    %510 = vmatpush2.msra.mxu0 0.0
    %511 = vmatprep.subr.mxu0 0.0
    %512 = vmatpush2.msra.mxu0 0.0
    %513 = vmatprep.subr.mxu0 0.0
    %514 = vmatpush2.msra.mxu0 0.0
    %515 = vmatprep.subr.mxu0 0.0
    %516 = vmatpush2.msra.mxu0 0.0
    %517 = vmatprep.subr.mxu0 0.0
    %518 = vmatpush2.msra.mxu0 0.0
    %519 = vmatprep.subr.mxu0 0.0
    %520 = vmatpush2.msra.mxu0 0.0
    %521 = vmatprep.subr.mxu0 0.0
    %522 = vmatpush2.msra.mxu0 0.0
    %523 = vmatprep.subr.mxu0 0.0
    %524 = vmatpush2.msra.mxu0 0.0
    %525 = vmatprep.subr.mxu0 0.0
    %526 = vmatpush2.msra.mxu0 0.0
    %527 = vmatprep.subr.mxu0 0.0
    %528 = vmatpush2.msra.mxu0 0.0
    %529 = vmatprep.subr.mxu0 0.0
    %530 = vmatpush2.msra.mxu0 0.0
    %531 = vmatprep.subr.mxu0 0.0
    %532 = vmatpush2.msra.mxu0 0.0
    %533 = vmatprep.subr.mxu0 0.0
    %534 = vmatpush2.msra.mxu0 0.0
    %535 = vmatprep.subr.mxu0 0.0
    %536 = vmatpush2.msra.mxu0 0.0
    %537 = vmatprep.subr.mxu0 0.0
    %538 = vmatpush2.msra.mxu0 0.0
    %539 = vmatprep.mubr.f32.mxu0 0.0
    %v540 = vand.u32 %v33, 4294901760
    %541 = vmatmul.mubr.f32.gmra.mxu0 %v540
    %v542 = vpop.f32.mrf.mxu0
    %v543 = vadd.f32 %v466, %v542
    %v544 = vpop.f32.mrf.mxu0
    %545 = vdwg.mxu0
    %v546 = vmul.f32 %v543, 5.656854
    %v547 = vld [vmem:[%s0 + $0x1] sm:$0x1]
    %v548 = vlaneseq
    %v549 = vshrl.u32 %v548, 7
    %v550 = vsub.s32 0, %v549
    %v551 = vrot.slane %v547, %v550
    %553 = vbcast.lane.b32.xlu0 %v551, 256
    %v554 = vpop.permute.xlu0 %553
    %vm555 = vcmp.eq.s32.totalorder %v554, %v27
    %v556 = vsel %vm555, 1, 0
    %v557 = vcvt.s32.f32 %v556
    %v559 = vsel %vm31, %v557, 0
    %561 = vmatprep.subr.mxu0 0.0
    %562 = vmatpush1.msra.mxu0 0.0
    %563 = vmatprep.subr.mxu0 0.0
    %564 = vmatpush1.msra.mxu0 0.0
    %565 = vmatprep.subr.mxu0 0.0
    %566 = vmatpush1.msra.mxu0 0.0
    %567 = vmatprep.subr.mxu0 0.0
    %568 = vmatpush1.msra.mxu0 0.0
    %569 = vmatprep.subr.mxu0 0.0
    %570 = vmatpush1.msra.mxu0 0.0
    %571 = vmatprep.subr.mxu0 0.0
    %572 = vmatpush1.msra.mxu0 0.0
    %573 = vmatprep.subr.mxu0 0.0
    %574 = vmatpush1.msra.mxu0 0.0
    %575 = vmatprep.subr.mxu0 0.0
    %576 = vmatpush1.msra.mxu0 0.0
    %577 = vmatprep.subr.mxu0 0.0
    %578 = vmatpush1.msra.mxu0 0.0
    %579 = vmatprep.subr.mxu0 0.0
    %580 = vmatpush1.msra.mxu0 0.0
    %581 = vmatprep.subr.mxu0 0.0
    %v582 = vand.u32 %v17, 4294901760
    %583 = vmatpush1.msra.mxu0 %v582
    %584 = vmatprep.subr.mxu0 0.0
    %v585 = vand.u32 %v16, 4294901760
    %586 = vmatpush1.msra.mxu0 %v585
    %587 = vmatprep.subr.mxu0 0.0
    %v588 = vand.u32 %v15, 4294901760
    %589 = vmatpush1.msra.mxu0 %v588
    %590 = vmatprep.subr.mxu0 0.0
    %v591 = vand.u32 %v14, 4294901760
    %592 = vmatpush1.msra.mxu0 %v591
    %593 = vmatprep.subr.mxu0 0.0
    %v594 = vand.u32 %v13, 4294901760
    %595 = vmatpush1.msra.mxu0 %v594
    %596 = vmatprep.subr.mxu0 0.0
    %v597 = vand.u32 %v12, 4294901760
    %598 = vmatpush1.msra.mxu0 %v597
    %599 = vmatprep.subr.mxu0 0.0
    %600 = vmatpush2.msra.mxu0 0.0
    %601 = vmatprep.subr.mxu0 0.0
    %602 = vmatpush2.msra.mxu0 0.0
    %603 = vmatprep.subr.mxu0 0.0
    %604 = vmatpush2.msra.mxu0 0.0
    %605 = vmatprep.subr.mxu0 0.0
    %606 = vmatpush2.msra.mxu0 0.0
    %607 = vmatprep.subr.mxu0 0.0
    %608 = vmatpush2.msra.mxu0 0.0
    %609 = vmatprep.subr.mxu0 0.0
    %610 = vmatpush2.msra.mxu0 0.0
    %611 = vmatprep.subr.mxu0 0.0
    %612 = vmatpush2.msra.mxu0 0.0
    %613 = vmatprep.subr.mxu0 0.0
    %614 = vmatpush2.msra.mxu0 0.0
    %615 = vmatprep.subr.mxu0 0.0
    %616 = vmatpush2.msra.mxu0 0.0
    %617 = vmatprep.subr.mxu0 0.0
    %618 = vmatpush2.msra.mxu0 0.0
    %619 = vmatprep.subr.mxu0 0.0
    %620 = vmatpush2.msra.mxu0 0.0
    %621 = vmatprep.subr.mxu0 0.0
    %622 = vmatpush2.msra.mxu0 0.0
    %623 = vmatprep.subr.mxu0 0.0
    %624 = vmatpush2.msra.mxu0 0.0
    %625 = vmatprep.subr.mxu0 0.0
    %626 = vmatpush2.msra.mxu0 0.0
    %627 = vmatprep.subr.mxu0 0.0
    %628 = vmatpush2.msra.mxu0 0.0
    %629 = vmatprep.subr.mxu0 0.0
    %630 = vmatpush2.msra.mxu0 0.0
    %631 = vmatprep.mubr.f32.mxu0 0.0
    %v632 = vand.u32 %v559, 4294901760
    %v633 = vsub.f32 %v559, %v632
    %v634 = vand.u32 %v633, 4294901760
    %v635 = vsub.f32 %v633, %v634
    %v636 = vand.u32 %v635, 4294901760
    %637 = vmatmul.mubr.f32.gmra.mxu0 %v636
    %v638 = vpop.f32.mrf.mxu0
    %v639 = vadd.f32 0.0, %v638
    %v640 = vpop.f32.mrf.mxu0
    %641 = vdwg.mxu0
    %642 = vmatprep.subr.mxu0 0.0
    %643 = vmatpush1.msra.mxu0 0.0
    %644 = vmatprep.subr.mxu0 0.0
    %645 = vmatpush1.msra.mxu0 0.0
    %646 = vmatprep.subr.mxu0 0.0
    %647 = vmatpush1.msra.mxu0 0.0
    %648 = vmatprep.subr.mxu0 0.0
    %649 = vmatpush1.msra.mxu0 0.0
    %650 = vmatprep.subr.mxu0 0.0
    %651 = vmatpush1.msra.mxu0 0.0
    %652 = vmatprep.subr.mxu0 0.0
    %653 = vmatpush1.msra.mxu0 0.0
    %654 = vmatprep.subr.mxu0 0.0
    %655 = vmatpush1.msra.mxu0 0.0
    %656 = vmatprep.subr.mxu0 0.0
    %657 = vmatpush1.msra.mxu0 0.0
    %658 = vmatprep.subr.mxu0 0.0
    %659 = vmatpush1.msra.mxu0 0.0
    %660 = vmatprep.subr.mxu0 0.0
    %661 = vmatpush1.msra.mxu0 0.0
    %662 = vmatprep.subr.mxu0 0.0
    %v663 = vand.u32 %v17, 4294901760
    %v664 = vsub.f32 %v17, %v663
    %v665 = vand.u32 %v664, 4294901760
    %v666 = vsub.f32 %v664, %v665
    %v667 = vand.u32 %v666, 4294901760
    %668 = vmatpush1.msra.mxu0 %v667
    %669 = vmatprep.subr.mxu0 0.0
    %v670 = vand.u32 %v16, 4294901760
    %v671 = vsub.f32 %v16, %v670
    %v672 = vand.u32 %v671, 4294901760
    %v673 = vsub.f32 %v671, %v672
    %v674 = vand.u32 %v673, 4294901760
    %675 = vmatpush1.msra.mxu0 %v674
    %676 = vmatprep.subr.mxu0 0.0
    %v677 = vand.u32 %v15, 4294901760
    %v678 = vsub.f32 %v15, %v677
    %v679 = vand.u32 %v678, 4294901760
    %v680 = vsub.f32 %v678, %v679
    %v681 = vand.u32 %v680, 4294901760
    %682 = vmatpush1.msra.mxu0 %v681
    %683 = vmatprep.subr.mxu0 0.0
    %v684 = vand.u32 %v14, 4294901760
    %v685 = vsub.f32 %v14, %v684
    %v686 = vand.u32 %v685, 4294901760
    %v687 = vsub.f32 %v685, %v686
    %v688 = vand.u32 %v687, 4294901760
    %689 = vmatpush1.msra.mxu0 %v688
    %690 = vmatprep.subr.mxu0 0.0
    %v691 = vand.u32 %v13, 4294901760
    %v692 = vsub.f32 %v13, %v691
    %v693 = vand.u32 %v692, 4294901760
    %v694 = vsub.f32 %v692, %v693
    %v695 = vand.u32 %v694, 4294901760
    %696 = vmatpush1.msra.mxu0 %v695
    %697 = vmatprep.subr.mxu0 0.0
    %v698 = vand.u32 %v12, 4294901760
    %v699 = vsub.f32 %v12, %v698
    %v700 = vand.u32 %v699, 4294901760
    %v701 = vsub.f32 %v699, %v700
    %v702 = vand.u32 %v701, 4294901760
    %703 = vmatpush1.msra.mxu0 %v702
    %704 = vmatprep.subr.mxu0 0.0
    %705 = vmatpush2.msra.mxu0 0.0
    %706 = vmatprep.subr.mxu0 0.0
    %707 = vmatpush2.msra.mxu0 0.0
    %708 = vmatprep.subr.mxu0 0.0
    %709 = vmatpush2.msra.mxu0 0.0
    %710 = vmatprep.subr.mxu0 0.0
    %711 = vmatpush2.msra.mxu0 0.0
    %712 = vmatprep.subr.mxu0 0.0
    %713 = vmatpush2.msra.mxu0 0.0
    %714 = vmatprep.subr.mxu0 0.0
    %715 = vmatpush2.msra.mxu0 0.0
    %716 = vmatprep.subr.mxu0 0.0
    %717 = vmatpush2.msra.mxu0 0.0
    %718 = vmatprep.subr.mxu0 0.0
    %719 = vmatpush2.msra.mxu0 0.0
    %720 = vmatprep.subr.mxu0 0.0
    %721 = vmatpush2.msra.mxu0 0.0
    %722 = vmatprep.subr.mxu0 0.0
    %723 = vmatpush2.msra.mxu0 0.0
    %724 = vmatprep.subr.mxu0 0.0
    %725 = vmatpush2.msra.mxu0 0.0
    %726 = vmatprep.subr.mxu0 0.0
    %727 = vmatpush2.msra.mxu0 0.0
    %728 = vmatprep.subr.mxu0 0.0
    %729 = vmatpush2.msra.mxu0 0.0
    %730 = vmatprep.subr.mxu0 0.0
    %731 = vmatpush2.msra.mxu0 0.0
    %732 = vmatprep.subr.mxu0 0.0
    %733 = vmatpush2.msra.mxu0 0.0
    %734 = vmatprep.subr.mxu0 0.0
    %735 = vmatpush2.msra.mxu0 0.0
    %736 = vmatprep.mubr.f32.mxu0 0.0
    %v737 = vand.u32 %v559, 4294901760
    %738 = vmatmul.mubr.f32.gmra.mxu0 %v737
    %v739 = vpop.f32.mrf.mxu0
    %v740 = vadd.f32 %v639, %v739
    %v741 = vpop.f32.mrf.mxu0
    %742 = vdwg.mxu0
    %743 = vmatprep.subr.mxu0 0.0
    %744 = vmatpush1.msra.mxu0 0.0
    %745 = vmatprep.subr.mxu0 0.0
    %746 = vmatpush1.msra.mxu0 0.0
    %747 = vmatprep.subr.mxu0 0.0
    %748 = vmatpush1.msra.mxu0 0.0
    %749 = vmatprep.subr.mxu0 0.0
    %750 = vmatpush1.msra.mxu0 0.0
    %751 = vmatprep.subr.mxu0 0.0
    %752 = vmatpush1.msra.mxu0 0.0
    %753 = vmatprep.subr.mxu0 0.0
    %754 = vmatpush1.msra.mxu0 0.0
    %755 = vmatprep.subr.mxu0 0.0
    %756 = vmatpush1.msra.mxu0 0.0
    %757 = vmatprep.subr.mxu0 0.0
    %758 = vmatpush1.msra.mxu0 0.0
    %759 = vmatprep.subr.mxu0 0.0
    %760 = vmatpush1.msra.mxu0 0.0
    %761 = vmatprep.subr.mxu0 0.0
    %762 = vmatpush1.msra.mxu0 0.0
    %763 = vmatprep.subr.mxu0 0.0
    %v764 = vand.u32 %v17, 4294901760
    %v765 = vsub.f32 %v17, %v764
    %766 = vmatpush1.msra.mxu0 %v765
    %767 = vmatprep.subr.mxu0 0.0
    %v768 = vand.u32 %v16, 4294901760
    %v769 = vsub.f32 %v16, %v768
    %770 = vmatpush1.msra.mxu0 %v769
    %771 = vmatprep.subr.mxu0 0.0
    %v772 = vand.u32 %v15, 4294901760
    %v773 = vsub.f32 %v15, %v772
    %774 = vmatpush1.msra.mxu0 %v773
    %775 = vmatprep.subr.mxu0 0.0
    %v776 = vand.u32 %v14, 4294901760
    %v777 = vsub.f32 %v14, %v776
    %778 = vmatpush1.msra.mxu0 %v777
    %779 = vmatprep.subr.mxu0 0.0
    %v780 = vand.u32 %v13, 4294901760
    %v781 = vsub.f32 %v13, %v780
    %782 = vmatpush1.msra.mxu0 %v781
    %783 = vmatprep.subr.mxu0 0.0
    %v784 = vand.u32 %v12, 4294901760
    %v785 = vsub.f32 %v12, %v784
    %786 = vmatpush1.msra.mxu0 %v785
    %787 = vmatprep.subr.mxu0 0.0
    %788 = vmatpush2.msra.mxu0 0.0
    %789 = vmatprep.subr.mxu0 0.0
    %790 = vmatpush2.msra.mxu0 0.0
    %791 = vmatprep.subr.mxu0 0.0
    %792 = vmatpush2.msra.mxu0 0.0
    %793 = vmatprep.subr.mxu0 0.0
    %794 = vmatpush2.msra.mxu0 0.0
    %795 = vmatprep.subr.mxu0 0.0
    %796 = vmatpush2.msra.mxu0 0.0
    %797 = vmatprep.subr.mxu0 0.0
    %798 = vmatpush2.msra.mxu0 0.0
    %799 = vmatprep.subr.mxu0 0.0
    %800 = vmatpush2.msra.mxu0 0.0
    %801 = vmatprep.subr.mxu0 0.0
    %802 = vmatpush2.msra.mxu0 0.0
    %803 = vmatprep.subr.mxu0 0.0
    %804 = vmatpush2.msra.mxu0 0.0
    %805 = vmatprep.subr.mxu0 0.0
    %806 = vmatpush2.msra.mxu0 0.0
    %807 = vmatprep.subr.mxu0 0.0
    %808 = vmatpush2.msra.mxu0 0.0
    %809 = vmatprep.subr.mxu0 0.0
    %810 = vmatpush2.msra.mxu0 0.0
    %811 = vmatprep.subr.mxu0 0.0
    %812 = vmatpush2.msra.mxu0 0.0
    %813 = vmatprep.subr.mxu0 0.0
    %814 = vmatpush2.msra.mxu0 0.0
    %815 = vmatprep.subr.mxu0 0.0
    %816 = vmatpush2.msra.mxu0 0.0
    %817 = vmatprep.subr.mxu0 0.0
    %818 = vmatpush2.msra.mxu0 0.0
    %819 = vmatprep.mubr.f32.mxu0 0.0
    %v820 = vand.u32 %v559, 4294901760
    %v821 = vsub.f32 %v559, %v820
    %822 = vmatmul.mubr.f32.gmra.mxu0 %v821
    %v823 = vpop.f32.mrf.mxu0
    %v824 = vadd.f32 %v740, %v823
    %v825 = vpop.f32.mrf.mxu0
    %826 = vdwg.mxu0
    %827 = vmatprep.subr.mxu0 0.0
    %828 = vmatpush1.msra.mxu0 0.0
    %829 = vmatprep.subr.mxu0 0.0
    %830 = vmatpush1.msra.mxu0 0.0
    %831 = vmatprep.subr.mxu0 0.0
    %832 = vmatpush1.msra.mxu0 0.0
    %833 = vmatprep.subr.mxu0 0.0
    %834 = vmatpush1.msra.mxu0 0.0
    %835 = vmatprep.subr.mxu0 0.0
    %836 = vmatpush1.msra.mxu0 0.0
    %837 = vmatprep.subr.mxu0 0.0
    %838 = vmatpush1.msra.mxu0 0.0
    %839 = vmatprep.subr.mxu0 0.0
    %840 = vmatpush1.msra.mxu0 0.0
    %841 = vmatprep.subr.mxu0 0.0
    %842 = vmatpush1.msra.mxu0 0.0
    %843 = vmatprep.subr.mxu0 0.0
    %844 = vmatpush1.msra.mxu0 0.0
    %845 = vmatprep.subr.mxu0 0.0
    %846 = vmatpush1.msra.mxu0 0.0
    %847 = vmatprep.subr.mxu0 0.0
    %v848 = vand.u32 %v17, 4294901760
    %849 = vmatpush1.msra.mxu0 %v848
    %850 = vmatprep.subr.mxu0 0.0
    %v851 = vand.u32 %v16, 4294901760
    %852 = vmatpush1.msra.mxu0 %v851
    %853 = vmatprep.subr.mxu0 0.0
    %v854 = vand.u32 %v15, 4294901760
    %855 = vmatpush1.msra.mxu0 %v854
    %856 = vmatprep.subr.mxu0 0.0
    %v857 = vand.u32 %v14, 4294901760
    %858 = vmatpush1.msra.mxu0 %v857
    %859 = vmatprep.subr.mxu0 0.0
    %v860 = vand.u32 %v13, 4294901760
    %861 = vmatpush1.msra.mxu0 %v860
    %862 = vmatprep.subr.mxu0 0.0
    %v863 = vand.u32 %v12, 4294901760
    %864 = vmatpush1.msra.mxu0 %v863
    %865 = vmatprep.subr.mxu0 0.0
    %866 = vmatpush2.msra.mxu0 0.0
    %867 = vmatprep.subr.mxu0 0.0
    %868 = vmatpush2.msra.mxu0 0.0
    %869 = vmatprep.subr.mxu0 0.0
    %870 = vmatpush2.msra.mxu0 0.0
    %871 = vmatprep.subr.mxu0 0.0
    %872 = vmatpush2.msra.mxu0 0.0
    %873 = vmatprep.subr.mxu0 0.0
    %874 = vmatpush2.msra.mxu0 0.0
    %875 = vmatprep.subr.mxu0 0.0
    %876 = vmatpush2.msra.mxu0 0.0
    %877 = vmatprep.subr.mxu0 0.0
    %878 = vmatpush2.msra.mxu0 0.0
    %879 = vmatprep.subr.mxu0 0.0
    %880 = vmatpush2.msra.mxu0 0.0
    %881 = vmatprep.subr.mxu0 0.0
    %882 = vmatpush2.msra.mxu0 0.0
    %883 = vmatprep.subr.mxu0 0.0
    %884 = vmatpush2.msra.mxu0 0.0
    %885 = vmatprep.subr.mxu0 0.0
    %886 = vmatpush2.msra.mxu0 0.0
    %887 = vmatprep.subr.mxu0 0.0
    %888 = vmatpush2.msra.mxu0 0.0
    %889 = vmatprep.subr.mxu0 0.0
    %890 = vmatpush2.msra.mxu0 0.0
    %891 = vmatprep.subr.mxu0 0.0
    %892 = vmatpush2.msra.mxu0 0.0
    %893 = vmatprep.subr.mxu0 0.0
    %894 = vmatpush2.msra.mxu0 0.0
    %895 = vmatprep.subr.mxu0 0.0
    %896 = vmatpush2.msra.mxu0 0.0
    %897 = vmatprep.mubr.f32.mxu0 0.0
    %v898 = vand.u32 %v559, 4294901760
    %v899 = vsub.f32 %v559, %v898
    %v900 = vand.u32 %v899, 4294901760
    %901 = vmatmul.mubr.f32.gmra.mxu0 %v900
    %v902 = vpop.f32.mrf.mxu0
    %v903 = vadd.f32 %v824, %v902
    %v904 = vpop.f32.mrf.mxu0
    %905 = vdwg.mxu0
    %906 = vmatprep.subr.mxu0 0.0
    %907 = vmatpush1.msra.mxu0 0.0
    %908 = vmatprep.subr.mxu0 0.0
    %909 = vmatpush1.msra.mxu0 0.0
    %910 = vmatprep.subr.mxu0 0.0
    %911 = vmatpush1.msra.mxu0 0.0
    %912 = vmatprep.subr.mxu0 0.0
    %913 = vmatpush1.msra.mxu0 0.0
    %914 = vmatprep.subr.mxu0 0.0
    %915 = vmatpush1.msra.mxu0 0.0
    %916 = vmatprep.subr.mxu0 0.0
    %917 = vmatpush1.msra.mxu0 0.0
    %918 = vmatprep.subr.mxu0 0.0
    %919 = vmatpush1.msra.mxu0 0.0
    %920 = vmatprep.subr.mxu0 0.0
    %921 = vmatpush1.msra.mxu0 0.0
    %922 = vmatprep.subr.mxu0 0.0
    %923 = vmatpush1.msra.mxu0 0.0
    %924 = vmatprep.subr.mxu0 0.0
    %925 = vmatpush1.msra.mxu0 0.0
    %926 = vmatprep.subr.mxu0 0.0
    %v927 = vand.u32 %v17, 4294901760
    %v928 = vsub.f32 %v17, %v927
    %v929 = vand.u32 %v928, 4294901760
    %930 = vmatpush1.msra.mxu0 %v929
    %931 = vmatprep.subr.mxu0 0.0
    %v932 = vand.u32 %v16, 4294901760
    %v933 = vsub.f32 %v16, %v932
    %v934 = vand.u32 %v933, 4294901760
    %935 = vmatpush1.msra.mxu0 %v934
    %936 = vmatprep.subr.mxu0 0.0
    %v937 = vand.u32 %v15, 4294901760
    %v938 = vsub.f32 %v15, %v937
    %v939 = vand.u32 %v938, 4294901760
    %940 = vmatpush1.msra.mxu0 %v939
    %941 = vmatprep.subr.mxu0 0.0
    %v942 = vand.u32 %v14, 4294901760
    %v943 = vsub.f32 %v14, %v942
    %v944 = vand.u32 %v943, 4294901760
    %945 = vmatpush1.msra.mxu0 %v944
    %946 = vmatprep.subr.mxu0 0.0
    %v947 = vand.u32 %v13, 4294901760
    %v948 = vsub.f32 %v13, %v947
    %v949 = vand.u32 %v948, 4294901760
    %950 = vmatpush1.msra.mxu0 %v949
    %951 = vmatprep.subr.mxu0 0.0
    %v952 = vand.u32 %v12, 4294901760
    %v953 = vsub.f32 %v12, %v952
    %v954 = vand.u32 %v953, 4294901760
    %955 = vmatpush1.msra.mxu0 %v954
    %956 = vmatprep.subr.mxu0 0.0
    %957 = vmatpush2.msra.mxu0 0.0
    %958 = vmatprep.subr.mxu0 0.0
    %959 = vmatpush2.msra.mxu0 0.0
    %960 = vmatprep.subr.mxu0 0.0
    %961 = vmatpush2.msra.mxu0 0.0
    %962 = vmatprep.subr.mxu0 0.0
    %963 = vmatpush2.msra.mxu0 0.0
    %964 = vmatprep.subr.mxu0 0.0
    %965 = vmatpush2.msra.mxu0 0.0
    %966 = vmatprep.subr.mxu0 0.0
    %967 = vmatpush2.msra.mxu0 0.0
    %968 = vmatprep.subr.mxu0 0.0
    %969 = vmatpush2.msra.mxu0 0.0
    %970 = vmatprep.subr.mxu0 0.0
    %971 = vmatpush2.msra.mxu0 0.0
    %972 = vmatprep.subr.mxu0 0.0
    %973 = vmatpush2.msra.mxu0 0.0
    %974 = vmatprep.subr.mxu0 0.0
    %975 = vmatpush2.msra.mxu0 0.0
    %976 = vmatprep.subr.mxu0 0.0
    %977 = vmatpush2.msra.mxu0 0.0
    %978 = vmatprep.subr.mxu0 0.0
    %979 = vmatpush2.msra.mxu0 0.0
    %980 = vmatprep.subr.mxu0 0.0
    %981 = vmatpush2.msra.mxu0 0.0
    %982 = vmatprep.subr.mxu0 0.0
    %983 = vmatpush2.msra.mxu0 0.0
    %984 = vmatprep.subr.mxu0 0.0
    %985 = vmatpush2.msra.mxu0 0.0
    %986 = vmatprep.subr.mxu0 0.0
    %987 = vmatpush2.msra.mxu0 0.0
    %988 = vmatprep.mubr.f32.mxu0 0.0
    %v989 = vand.u32 %v559, 4294901760
    %990 = vmatmul.mubr.f32.gmra.mxu0 %v989
    %v991 = vpop.f32.mrf.mxu0
    %v992 = vadd.f32 %v903, %v991
    %v993 = vpop.f32.mrf.mxu0
    %994 = vdwg.mxu0
    %995 = vmatprep.subr.mxu0 0.0
    %996 = vmatpush1.msra.mxu0 0.0
    %997 = vmatprep.subr.mxu0 0.0
    %998 = vmatpush1.msra.mxu0 0.0
    %999 = vmatprep.subr.mxu0 0.0
    %1000 = vmatpush1.msra.mxu0 0.0
    %1001 = vmatprep.subr.mxu0 0.0
    %1002 = vmatpush1.msra.mxu0 0.0
    %1003 = vmatprep.subr.mxu0 0.0
    %1004 = vmatpush1.msra.mxu0 0.0
    %1005 = vmatprep.subr.mxu0 0.0
    %1006 = vmatpush1.msra.mxu0 0.0
    %1007 = vmatprep.subr.mxu0 0.0
    %1008 = vmatpush1.msra.mxu0 0.0
    %1009 = vmatprep.subr.mxu0 0.0
    %1010 = vmatpush1.msra.mxu0 0.0
    %1011 = vmatprep.subr.mxu0 0.0
    %1012 = vmatpush1.msra.mxu0 0.0
    %1013 = vmatprep.subr.mxu0 0.0
    %1014 = vmatpush1.msra.mxu0 0.0
    %1015 = vmatprep.subr.mxu0 0.0
    %v1016 = vand.u32 %v17, 4294901760
    %1017 = vmatpush1.msra.mxu0 %v1016
    %1018 = vmatprep.subr.mxu0 0.0
    %v1019 = vand.u32 %v16, 4294901760
    %1020 = vmatpush1.msra.mxu0 %v1019
    %1021 = vmatprep.subr.mxu0 0.0
    %v1022 = vand.u32 %v15, 4294901760
    %1023 = vmatpush1.msra.mxu0 %v1022
    %1024 = vmatprep.subr.mxu0 0.0
    %v1025 = vand.u32 %v14, 4294901760
    %1026 = vmatpush1.msra.mxu0 %v1025
    %1027 = vmatprep.subr.mxu0 0.0
    %v1028 = vand.u32 %v13, 4294901760
    %1029 = vmatpush1.msra.mxu0 %v1028
    %1030 = vmatprep.subr.mxu0 0.0
    %v1031 = vand.u32 %v12, 4294901760
    %1032 = vmatpush1.msra.mxu0 %v1031
    %1033 = vmatprep.subr.mxu0 0.0
    %1034 = vmatpush2.msra.mxu0 0.0
    %1035 = vmatprep.subr.mxu0 0.0
    %1036 = vmatpush2.msra.mxu0 0.0
    %1037 = vmatprep.subr.mxu0 0.0
    %1038 = vmatpush2.msra.mxu0 0.0
    %1039 = vmatprep.subr.mxu0 0.0
    %1040 = vmatpush2.msra.mxu0 0.0
    %1041 = vmatprep.subr.mxu0 0.0
    %1042 = vmatpush2.msra.mxu0 0.0
    %1043 = vmatprep.subr.mxu0 0.0
    %1044 = vmatpush2.msra.mxu0 0.0
    %1045 = vmatprep.subr.mxu0 0.0
    %1046 = vmatpush2.msra.mxu0 0.0
    %1047 = vmatprep.subr.mxu0 0.0
    %1048 = vmatpush2.msra.mxu0 0.0
    %1049 = vmatprep.subr.mxu0 0.0
    %1050 = vmatpush2.msra.mxu0 0.0
    %1051 = vmatprep.subr.mxu0 0.0
    %1052 = vmatpush2.msra.mxu0 0.0
    %1053 = vmatprep.subr.mxu0 0.0
    %1054 = vmatpush2.msra.mxu0 0.0
    %1055 = vmatprep.subr.mxu0 0.0
    %1056 = vmatpush2.msra.mxu0 0.0
    %1057 = vmatprep.subr.mxu0 0.0
    %1058 = vmatpush2.msra.mxu0 0.0
    %1059 = vmatprep.subr.mxu0 0.0
    %1060 = vmatpush2.msra.mxu0 0.0
    %1061 = vmatprep.subr.mxu0 0.0
    %1062 = vmatpush2.msra.mxu0 0.0
    %1063 = vmatprep.subr.mxu0 0.0
    %1064 = vmatpush2.msra.mxu0 0.0
    %1065 = vmatprep.mubr.f32.mxu0 0.0
    %v1066 = vand.u32 %v559, 4294901760
    %1067 = vmatmul.mubr.f32.gmra.mxu0 %v1066
    %v1068 = vpop.f32.mrf.mxu0
    %v1069 = vadd.f32 %v992, %v1068
    %v1070 = vpop.f32.mrf.mxu0
    %1071 = vdwg.mxu0
    %v1072 = vmul.f32 %v1069, 5.656854
    %v1073 = vld [vmem:[%s0 + $0x2] sm:$0x1]
    %v1074 = vlaneseq
    %v1075 = vshrl.u32 %v1074, 7
    %v1076 = vsub.s32 0, %v1075
    %v1077 = vrot.slane %v1073, %v1076
    %1079 = vbcast.lane.b32.xlu0 %v1077, 256
    %v1080 = vpop.permute.xlu0 %1079
    %vm1081 = vcmp.eq.s32.totalorder %v1080, %v27
    %v1082 = vsel %vm1081, 1, 0
    %v1083 = vcvt.s32.f32 %v1082
    %v1085 = vsel %vm31, %v1083, 0
    %1087 = vmatprep.subr.mxu0 0.0
    %1088 = vmatpush1.msra.mxu0 0.0
    %1089 = vmatprep.subr.mxu0 0.0
    %1090 = vmatpush1.msra.mxu0 0.0
    %1091 = vmatprep.subr.mxu0 0.0
    %1092 = vmatpush1.msra.mxu0 0.0
    %1093 = vmatprep.subr.mxu0 0.0
    %1094 = vmatpush1.msra.mxu0 0.0
    %1095 = vmatprep.subr.mxu0 0.0
    %1096 = vmatpush1.msra.mxu0 0.0
    %1097 = vmatprep.subr.mxu0 0.0
    %1098 = vmatpush1.msra.mxu0 0.0
    %1099 = vmatprep.subr.mxu0 0.0
    %1100 = vmatpush1.msra.mxu0 0.0
    %1101 = vmatprep.subr.mxu0 0.0
    %1102 = vmatpush1.msra.mxu0 0.0
    %1103 = vmatprep.subr.mxu0 0.0
    %1104 = vmatpush1.msra.mxu0 0.0
    %1105 = vmatprep.subr.mxu0 0.0
    %1106 = vmatpush1.msra.mxu0 0.0
    %1107 = vmatprep.subr.mxu0 0.0
    %v1108 = vand.u32 %v17, 4294901760
    %1109 = vmatpush1.msra.mxu0 %v1108
    %1110 = vmatprep.subr.mxu0 0.0
    %v1111 = vand.u32 %v16, 4294901760
    %1112 = vmatpush1.msra.mxu0 %v1111
    %1113 = vmatprep.subr.mxu0 0.0
    %v1114 = vand.u32 %v15, 4294901760
    %1115 = vmatpush1.msra.mxu0 %v1114
    %1116 = vmatprep.subr.mxu0 0.0
    %v1117 = vand.u32 %v14, 4294901760
    %1118 = vmatpush1.msra.mxu0 %v1117
    %1119 = vmatprep.subr.mxu0 0.0
    %v1120 = vand.u32 %v13, 4294901760
    %1121 = vmatpush1.msra.mxu0 %v1120
    %1122 = vmatprep.subr.mxu0 0.0
    %v1123 = vand.u32 %v12, 4294901760
    %1124 = vmatpush1.msra.mxu0 %v1123
    %1125 = vmatprep.subr.mxu0 0.0
    %1126 = vmatpush2.msra.mxu0 0.0
    %1127 = vmatprep.subr.mxu0 0.0
    %1128 = vmatpush2.msra.mxu0 0.0
    %1129 = vmatprep.subr.mxu0 0.0
    %1130 = vmatpush2.msra.mxu0 0.0
    %1131 = vmatprep.subr.mxu0 0.0
    %1132 = vmatpush2.msra.mxu0 0.0
    %1133 = vmatprep.subr.mxu0 0.0
    %1134 = vmatpush2.msra.mxu0 0.0
    %1135 = vmatprep.subr.mxu0 0.0
    %1136 = vmatpush2.msra.mxu0 0.0
    %1137 = vmatprep.subr.mxu0 0.0
    %1138 = vmatpush2.msra.mxu0 0.0
    %1139 = vmatprep.subr.mxu0 0.0
    %1140 = vmatpush2.msra.mxu0 0.0
    %1141 = vmatprep.subr.mxu0 0.0
    %1142 = vmatpush2.msra.mxu0 0.0
    %1143 = vmatprep.subr.mxu0 0.0
    %1144 = vmatpush2.msra.mxu0 0.0
    %1145 = vmatprep.subr.mxu0 0.0
    %1146 = vmatpush2.msra.mxu0 0.0
    %1147 = vmatprep.subr.mxu0 0.0
    %1148 = vmatpush2.msra.mxu0 0.0
    %1149 = vmatprep.subr.mxu0 0.0
    %1150 = vmatpush2.msra.mxu0 0.0
    %1151 = vmatprep.subr.mxu0 0.0
    %1152 = vmatpush2.msra.mxu0 0.0
    %1153 = vmatprep.subr.mxu0 0.0
    %1154 = vmatpush2.msra.mxu0 0.0
    %1155 = vmatprep.subr.mxu0 0.0
    %1156 = vmatpush2.msra.mxu0 0.0
    %1157 = vmatprep.mubr.f32.mxu0 0.0
    %v1158 = vand.u32 %v1085, 4294901760
    %v1159 = vsub.f32 %v1085, %v1158
    %v1160 = vand.u32 %v1159, 4294901760
    %v1161 = vsub.f32 %v1159, %v1160
    %v1162 = vand.u32 %v1161, 4294901760
    %1163 = vmatmul.mubr.f32.gmra.mxu0 %v1162
    %v1164 = vpop.f32.mrf.mxu0
    %v1165 = vadd.f32 0.0, %v1164
    %v1166 = vpop.f32.mrf.mxu0
    %1167 = vdwg.mxu0
    %1168 = vmatprep.subr.mxu0 0.0
    %1169 = vmatpush1.msra.mxu0 0.0
    %1170 = vmatprep.subr.mxu0 0.0
    %1171 = vmatpush1.msra.mxu0 0.0
    %1172 = vmatprep.subr.mxu0 0.0
    %1173 = vmatpush1.msra.mxu0 0.0
    %1174 = vmatprep.subr.mxu0 0.0
    %1175 = vmatpush1.msra.mxu0 0.0
    %1176 = vmatprep.subr.mxu0 0.0
    %1177 = vmatpush1.msra.mxu0 0.0
    %1178 = vmatprep.subr.mxu0 0.0
    %1179 = vmatpush1.msra.mxu0 0.0
    %1180 = vmatprep.subr.mxu0 0.0
    %1181 = vmatpush1.msra.mxu0 0.0
    %1182 = vmatprep.subr.mxu0 0.0
    %1183 = vmatpush1.msra.mxu0 0.0
    %1184 = vmatprep.subr.mxu0 0.0
    %1185 = vmatpush1.msra.mxu0 0.0
    %1186 = vmatprep.subr.mxu0 0.0
    %1187 = vmatpush1.msra.mxu0 0.0
    %1188 = vmatprep.subr.mxu0 0.0
    %v1189 = vand.u32 %v17, 4294901760
    %v1190 = vsub.f32 %v17, %v1189
    %v1191 = vand.u32 %v1190, 4294901760
    %v1192 = vsub.f32 %v1190, %v1191
    %v1193 = vand.u32 %v1192, 4294901760
    %1194 = vmatpush1.msra.mxu0 %v1193
    %1195 = vmatprep.subr.mxu0 0.0
    %v1196 = vand.u32 %v16, 4294901760
    %v1197 = vsub.f32 %v16, %v1196
    %v1198 = vand.u32 %v1197, 4294901760
    %v1199 = vsub.f32 %v1197, %v1198
    %v1200 = vand.u32 %v1199, 4294901760
    %1201 = vmatpush1.msra.mxu0 %v1200
    %1202 = vmatprep.subr.mxu0 0.0
    %v1203 = vand.u32 %v15, 4294901760
    %v1204 = vsub.f32 %v15, %v1203
    %v1205 = vand.u32 %v1204, 4294901760
    %v1206 = vsub.f32 %v1204, %v1205
    %v1207 = vand.u32 %v1206, 4294901760
    %1208 = vmatpush1.msra.mxu0 %v1207
    %1209 = vmatprep.subr.mxu0 0.0
    %v1210 = vand.u32 %v14, 4294901760
    %v1211 = vsub.f32 %v14, %v1210
    %v1212 = vand.u32 %v1211, 4294901760
    %v1213 = vsub.f32 %v1211, %v1212
    %v1214 = vand.u32 %v1213, 4294901760
    %1215 = vmatpush1.msra.mxu0 %v1214
    %1216 = vmatprep.subr.mxu0 0.0
    %v1217 = vand.u32 %v13, 4294901760
    %v1218 = vsub.f32 %v13, %v1217
    %v1219 = vand.u32 %v1218, 4294901760
    %v1220 = vsub.f32 %v1218, %v1219
    %v1221 = vand.u32 %v1220, 4294901760
    %1222 = vmatpush1.msra.mxu0 %v1221
    %1223 = vmatprep.subr.mxu0 0.0
    %v1224 = vand.u32 %v12, 4294901760
    %v1225 = vsub.f32 %v12, %v1224
    %v1226 = vand.u32 %v1225, 4294901760
    %v1227 = vsub.f32 %v1225, %v1226
    %v1228 = vand.u32 %v1227, 4294901760
    %1229 = vmatpush1.msra.mxu0 %v1228
    %1230 = vmatprep.subr.mxu0 0.0
    %1231 = vmatpush2.msra.mxu0 0.0
    %1232 = vmatprep.subr.mxu0 0.0
    %1233 = vmatpush2.msra.mxu0 0.0
    %1234 = vmatprep.subr.mxu0 0.0
    %1235 = vmatpush2.msra.mxu0 0.0
    %1236 = vmatprep.subr.mxu0 0.0
    %1237 = vmatpush2.msra.mxu0 0.0
    %1238 = vmatprep.subr.mxu0 0.0
    %1239 = vmatpush2.msra.mxu0 0.0
    %1240 = vmatprep.subr.mxu0 0.0
    %1241 = vmatpush2.msra.mxu0 0.0
    %1242 = vmatprep.subr.mxu0 0.0
    %1243 = vmatpush2.msra.mxu0 0.0
    %1244 = vmatprep.subr.mxu0 0.0
    %1245 = vmatpush2.msra.mxu0 0.0
    %1246 = vmatprep.subr.mxu0 0.0
    %1247 = vmatpush2.msra.mxu0 0.0
    %1248 = vmatprep.subr.mxu0 0.0
    %1249 = vmatpush2.msra.mxu0 0.0
    %1250 = vmatprep.subr.mxu0 0.0
    %1251 = vmatpush2.msra.mxu0 0.0
    %1252 = vmatprep.subr.mxu0 0.0
    %1253 = vmatpush2.msra.mxu0 0.0
    %1254 = vmatprep.subr.mxu0 0.0
    %1255 = vmatpush2.msra.mxu0 0.0
    %1256 = vmatprep.subr.mxu0 0.0
    %1257 = vmatpush2.msra.mxu0 0.0
    %1258 = vmatprep.subr.mxu0 0.0
    %1259 = vmatpush2.msra.mxu0 0.0
    %1260 = vmatprep.subr.mxu0 0.0
    %1261 = vmatpush2.msra.mxu0 0.0
    %1262 = vmatprep.mubr.f32.mxu0 0.0
    %v1263 = vand.u32 %v1085, 4294901760
    %1264 = vmatmul.mubr.f32.gmra.mxu0 %v1263
    %v1265 = vpop.f32.mrf.mxu0
    %v1266 = vadd.f32 %v1165, %v1265
    %v1267 = vpop.f32.mrf.mxu0
    %1268 = vdwg.mxu0
    %1269 = vmatprep.subr.mxu0 0.0
    %1270 = vmatpush1.msra.mxu0 0.0
    %1271 = vmatprep.subr.mxu0 0.0
    %1272 = vmatpush1.msra.mxu0 0.0
    %1273 = vmatprep.subr.mxu0 0.0
    %1274 = vmatpush1.msra.mxu0 0.0
    %1275 = vmatprep.subr.mxu0 0.0
    %1276 = vmatpush1.msra.mxu0 0.0
    %1277 = vmatprep.subr.mxu0 0.0
    %1278 = vmatpush1.msra.mxu0 0.0
    %1279 = vmatprep.subr.mxu0 0.0
    %1280 = vmatpush1.msra.mxu0 0.0
    %1281 = vmatprep.subr.mxu0 0.0
    %1282 = vmatpush1.msra.mxu0 0.0
    %1283 = vmatprep.subr.mxu0 0.0
    %1284 = vmatpush1.msra.mxu0 0.0
    %1285 = vmatprep.subr.mxu0 0.0
    %1286 = vmatpush1.msra.mxu0 0.0
    %1287 = vmatprep.subr.mxu0 0.0
    %1288 = vmatpush1.msra.mxu0 0.0
    %1289 = vmatprep.subr.mxu0 0.0
    %v1290 = vand.u32 %v17, 4294901760
    %v1291 = vsub.f32 %v17, %v1290
    %1292 = vmatpush1.msra.mxu0 %v1291
    %1293 = vmatprep.subr.mxu0 0.0
    %v1294 = vand.u32 %v16, 4294901760
    %v1295 = vsub.f32 %v16, %v1294
    %1296 = vmatpush1.msra.mxu0 %v1295
    %1297 = vmatprep.subr.mxu0 0.0
    %v1298 = vand.u32 %v15, 4294901760
    %v1299 = vsub.f32 %v15, %v1298
    %1300 = vmatpush1.msra.mxu0 %v1299
    %1301 = vmatprep.subr.mxu0 0.0
    %v1302 = vand.u32 %v14, 4294901760
    %v1303 = vsub.f32 %v14, %v1302
    %1304 = vmatpush1.msra.mxu0 %v1303
    %1305 = vmatprep.subr.mxu0 0.0
    %v1306 = vand.u32 %v13, 4294901760
    %v1307 = vsub.f32 %v13, %v1306
    %1308 = vmatpush1.msra.mxu0 %v1307
    %1309 = vmatprep.subr.mxu0 0.0
    %v1310 = vand.u32 %v12, 4294901760
    %v1311 = vsub.f32 %v12, %v1310
    %1312 = vmatpush1.msra.mxu0 %v1311
    %1313 = vmatprep.subr.mxu0 0.0
    %1314 = vmatpush2.msra.mxu0 0.0
    %1315 = vmatprep.subr.mxu0 0.0
    %1316 = vmatpush2.msra.mxu0 0.0
    %1317 = vmatprep.subr.mxu0 0.0
    %1318 = vmatpush2.msra.mxu0 0.0
    %1319 = vmatprep.subr.mxu0 0.0
    %1320 = vmatpush2.msra.mxu0 0.0
    %1321 = vmatprep.subr.mxu0 0.0
    %1322 = vmatpush2.msra.mxu0 0.0
    %1323 = vmatprep.subr.mxu0 0.0
    %1324 = vmatpush2.msra.mxu0 0.0
    %1325 = vmatprep.subr.mxu0 0.0
    %1326 = vmatpush2.msra.mxu0 0.0
    %1327 = vmatprep.subr.mxu0 0.0
    %1328 = vmatpush2.msra.mxu0 0.0
    %1329 = vmatprep.subr.mxu0 0.0
    %1330 = vmatpush2.msra.mxu0 0.0
    %1331 = vmatprep.subr.mxu0 0.0
    %1332 = vmatpush2.msra.mxu0 0.0
    %1333 = vmatprep.subr.mxu0 0.0
    %1334 = vmatpush2.msra.mxu0 0.0
    %1335 = vmatprep.subr.mxu0 0.0
    %1336 = vmatpush2.msra.mxu0 0.0
    %1337 = vmatprep.subr.mxu0 0.0
    %1338 = vmatpush2.msra.mxu0 0.0
    %1339 = vmatprep.subr.mxu0 0.0
    %1340 = vmatpush2.msra.mxu0 0.0
    %1341 = vmatprep.subr.mxu0 0.0
    %1342 = vmatpush2.msra.mxu0 0.0
    %1343 = vmatprep.subr.mxu0 0.0
    %1344 = vmatpush2.msra.mxu0 0.0
    %1345 = vmatprep.mubr.f32.mxu0 0.0
    %v1346 = vand.u32 %v1085, 4294901760
    %v1347 = vsub.f32 %v1085, %v1346
    %1348 = vmatmul.mubr.f32.gmra.mxu0 %v1347
    %v1349 = vpop.f32.mrf.mxu0
    %v1350 = vadd.f32 %v1266, %v1349
    %v1351 = vpop.f32.mrf.mxu0
    %1352 = vdwg.mxu0
    %1353 = vmatprep.subr.mxu0 0.0
    %1354 = vmatpush1.msra.mxu0 0.0
    %1355 = vmatprep.subr.mxu0 0.0
    %1356 = vmatpush1.msra.mxu0 0.0
    %1357 = vmatprep.subr.mxu0 0.0
    %1358 = vmatpush1.msra.mxu0 0.0
    %1359 = vmatprep.subr.mxu0 0.0
    %1360 = vmatpush1.msra.mxu0 0.0
    %1361 = vmatprep.subr.mxu0 0.0
    %1362 = vmatpush1.msra.mxu0 0.0
    %1363 = vmatprep.subr.mxu0 0.0
    %1364 = vmatpush1.msra.mxu0 0.0
    %1365 = vmatprep.subr.mxu0 0.0
    %1366 = vmatpush1.msra.mxu0 0.0
    %1367 = vmatprep.subr.mxu0 0.0
    %1368 = vmatpush1.msra.mxu0 0.0
    %1369 = vmatprep.subr.mxu0 0.0
    %1370 = vmatpush1.msra.mxu0 0.0
    %1371 = vmatprep.subr.mxu0 0.0
    %1372 = vmatpush1.msra.mxu0 0.0
    %1373 = vmatprep.subr.mxu0 0.0
    %v1374 = vand.u32 %v17, 4294901760
    %1375 = vmatpush1.msra.mxu0 %v1374
    %1376 = vmatprep.subr.mxu0 0.0
    %v1377 = vand.u32 %v16, 4294901760
    %1378 = vmatpush1.msra.mxu0 %v1377
    %1379 = vmatprep.subr.mxu0 0.0
    %v1380 = vand.u32 %v15, 4294901760
    %1381 = vmatpush1.msra.mxu0 %v1380
    %1382 = vmatprep.subr.mxu0 0.0
    %v1383 = vand.u32 %v14, 4294901760
    %1384 = vmatpush1.msra.mxu0 %v1383
    %1385 = vmatprep.subr.mxu0 0.0
    %v1386 = vand.u32 %v13, 4294901760
    %1387 = vmatpush1.msra.mxu0 %v1386
    %1388 = vmatprep.subr.mxu0 0.0
    %v1389 = vand.u32 %v12, 4294901760
    %1390 = vmatpush1.msra.mxu0 %v1389
    %1391 = vmatprep.subr.mxu0 0.0
    %1392 = vmatpush2.msra.mxu0 0.0
    %1393 = vmatprep.subr.mxu0 0.0
    %1394 = vmatpush2.msra.mxu0 0.0
    %1395 = vmatprep.subr.mxu0 0.0
    %1396 = vmatpush2.msra.mxu0 0.0
    %1397 = vmatprep.subr.mxu0 0.0
    %1398 = vmatpush2.msra.mxu0 0.0
    %1399 = vmatprep.subr.mxu0 0.0
    %1400 = vmatpush2.msra.mxu0 0.0
    %1401 = vmatprep.subr.mxu0 0.0
    %1402 = vmatpush2.msra.mxu0 0.0
    %1403 = vmatprep.subr.mxu0 0.0
    %1404 = vmatpush2.msra.mxu0 0.0
    %1405 = vmatprep.subr.mxu0 0.0
    %1406 = vmatpush2.msra.mxu0 0.0
    %1407 = vmatprep.subr.mxu0 0.0
    %1408 = vmatpush2.msra.mxu0 0.0
    %1409 = vmatprep.subr.mxu0 0.0
    %1410 = vmatpush2.msra.mxu0 0.0
    %1411 = vmatprep.subr.mxu0 0.0
    %1412 = vmatpush2.msra.mxu0 0.0
    %1413 = vmatprep.subr.mxu0 0.0
    %1414 = vmatpush2.msra.mxu0 0.0
    %1415 = vmatprep.subr.mxu0 0.0
    %1416 = vmatpush2.msra.mxu0 0.0
    %1417 = vmatprep.subr.mxu0 0.0
    %1418 = vmatpush2.msra.mxu0 0.0
    %1419 = vmatprep.subr.mxu0 0.0
    %1420 = vmatpush2.msra.mxu0 0.0
    %1421 = vmatprep.subr.mxu0 0.0
    %1422 = vmatpush2.msra.mxu0 0.0
    %1423 = vmatprep.mubr.f32.mxu0 0.0
    %v1424 = vand.u32 %v1085, 4294901760
    %v1425 = vsub.f32 %v1085, %v1424
    %v1426 = vand.u32 %v1425, 4294901760
    %1427 = vmatmul.mubr.f32.gmra.mxu0 %v1426
    %v1428 = vpop.f32.mrf.mxu0
    %v1429 = vadd.f32 %v1350, %v1428
    %v1430 = vpop.f32.mrf.mxu0
    %1431 = vdwg.mxu0
    %1432 = vmatprep.subr.mxu0 0.0
    %1433 = vmatpush1.msra.mxu0 0.0
    %1434 = vmatprep.subr.mxu0 0.0
    %1435 = vmatpush1.msra.mxu0 0.0
    %1436 = vmatprep.subr.mxu0 0.0
    %1437 = vmatpush1.msra.mxu0 0.0
    %1438 = vmatprep.subr.mxu0 0.0
    %1439 = vmatpush1.msra.mxu0 0.0
    %1440 = vmatprep.subr.mxu0 0.0
    %1441 = vmatpush1.msra.mxu0 0.0
    %1442 = vmatprep.subr.mxu0 0.0
    %1443 = vmatpush1.msra.mxu0 0.0
    %1444 = vmatprep.subr.mxu0 0.0
    %1445 = vmatpush1.msra.mxu0 0.0
    %1446 = vmatprep.subr.mxu0 0.0
    %1447 = vmatpush1.msra.mxu0 0.0
    %1448 = vmatprep.subr.mxu0 0.0
    %1449 = vmatpush1.msra.mxu0 0.0
    %1450 = vmatprep.subr.mxu0 0.0
    %1451 = vmatpush1.msra.mxu0 0.0
    %1452 = vmatprep.subr.mxu0 0.0
    %v1453 = vand.u32 %v17, 4294901760
    %v1454 = vsub.f32 %v17, %v1453
    %v1455 = vand.u32 %v1454, 4294901760
    %1456 = vmatpush1.msra.mxu0 %v1455
    %1457 = vmatprep.subr.mxu0 0.0
    %v1458 = vand.u32 %v16, 4294901760
    %v1459 = vsub.f32 %v16, %v1458
    %v1460 = vand.u32 %v1459, 4294901760
    %1461 = vmatpush1.msra.mxu0 %v1460
    %1462 = vmatprep.subr.mxu0 0.0
    %v1463 = vand.u32 %v15, 4294901760
    %v1464 = vsub.f32 %v15, %v1463
    %v1465 = vand.u32 %v1464, 4294901760
    %1466 = vmatpush1.msra.mxu0 %v1465
    %1467 = vmatprep.subr.mxu0 0.0
    %v1468 = vand.u32 %v14, 4294901760
    %v1469 = vsub.f32 %v14, %v1468
    %v1470 = vand.u32 %v1469, 4294901760
    %1471 = vmatpush1.msra.mxu0 %v1470
    %1472 = vmatprep.subr.mxu0 0.0
    %v1473 = vand.u32 %v13, 4294901760
    %v1474 = vsub.f32 %v13, %v1473
    %v1475 = vand.u32 %v1474, 4294901760
    %1476 = vmatpush1.msra.mxu0 %v1475
    %1477 = vmatprep.subr.mxu0 0.0
    %v1478 = vand.u32 %v12, 4294901760
    %v1479 = vsub.f32 %v12, %v1478
    %v1480 = vand.u32 %v1479, 4294901760
    %1481 = vmatpush1.msra.mxu0 %v1480
    %1482 = vmatprep.subr.mxu0 0.0
    %1483 = vmatpush2.msra.mxu0 0.0
    %1484 = vmatprep.subr.mxu0 0.0
    %1485 = vmatpush2.msra.mxu0 0.0
    %1486 = vmatprep.subr.mxu0 0.0
    %1487 = vmatpush2.msra.mxu0 0.0
    %1488 = vmatprep.subr.mxu0 0.0
    %1489 = vmatpush2.msra.mxu0 0.0
    %1490 = vmatprep.subr.mxu0 0.0
    %1491 = vmatpush2.msra.mxu0 0.0
    %1492 = vmatprep.subr.mxu0 0.0
    %1493 = vmatpush2.msra.mxu0 0.0
    %1494 = vmatprep.subr.mxu0 0.0
    %1495 = vmatpush2.msra.mxu0 0.0
    %1496 = vmatprep.subr.mxu0 0.0
    %1497 = vmatpush2.msra.mxu0 0.0
    %1498 = vmatprep.subr.mxu0 0.0
    %1499 = vmatpush2.msra.mxu0 0.0
    %1500 = vmatprep.subr.mxu0 0.0
    %1501 = vmatpush2.msra.mxu0 0.0
    %1502 = vmatprep.subr.mxu0 0.0
    %1503 = vmatpush2.msra.mxu0 0.0
    %1504 = vmatprep.subr.mxu0 0.0
    %1505 = vmatpush2.msra.mxu0 0.0
    %1506 = vmatprep.subr.mxu0 0.0
    %1507 = vmatpush2.msra.mxu0 0.0
    %1508 = vmatprep.subr.mxu0 0.0
    %1509 = vmatpush2.msra.mxu0 0.0
    %1510 = vmatprep.subr.mxu0 0.0
    %1511 = vmatpush2.msra.mxu0 0.0
    %1512 = vmatprep.subr.mxu0 0.0
    %1513 = vmatpush2.msra.mxu0 0.0
    %1514 = vmatprep.mubr.f32.mxu0 0.0
    %v1515 = vand.u32 %v1085, 4294901760
    %1516 = vmatmul.mubr.f32.gmra.mxu0 %v1515
    %v1517 = vpop.f32.mrf.mxu0
    %v1518 = vadd.f32 %v1429, %v1517
    %v1519 = vpop.f32.mrf.mxu0
    %1520 = vdwg.mxu0
    %1521 = vmatprep.subr.mxu0 0.0
    %1522 = vmatpush1.msra.mxu0 0.0
    %1523 = vmatprep.subr.mxu0 0.0
    %1524 = vmatpush1.msra.mxu0 0.0
    %1525 = vmatprep.subr.mxu0 0.0
    %1526 = vmatpush1.msra.mxu0 0.0
    %1527 = vmatprep.subr.mxu0 0.0
    %1528 = vmatpush1.msra.mxu0 0.0
    %1529 = vmatprep.subr.mxu0 0.0
    %1530 = vmatpush1.msra.mxu0 0.0
    %1531 = vmatprep.subr.mxu0 0.0
    %1532 = vmatpush1.msra.mxu0 0.0
    %1533 = vmatprep.subr.mxu0 0.0
    %1534 = vmatpush1.msra.mxu0 0.0
    %1535 = vmatprep.subr.mxu0 0.0
    %1536 = vmatpush1.msra.mxu0 0.0
    %1537 = vmatprep.subr.mxu0 0.0
    %1538 = vmatpush1.msra.mxu0 0.0
    %1539 = vmatprep.subr.mxu0 0.0
    %1540 = vmatpush1.msra.mxu0 0.0
    %1541 = vmatprep.subr.mxu0 0.0
    %v1542 = vand.u32 %v17, 4294901760
    %1543 = vmatpush1.msra.mxu0 %v1542
    %1544 = vmatprep.subr.mxu0 0.0
    %v1545 = vand.u32 %v16, 4294901760
    %1546 = vmatpush1.msra.mxu0 %v1545
    %1547 = vmatprep.subr.mxu0 0.0
    %v1548 = vand.u32 %v15, 4294901760
    %1549 = vmatpush1.msra.mxu0 %v1548
    %1550 = vmatprep.subr.mxu0 0.0
    %v1551 = vand.u32 %v14, 4294901760
    %1552 = vmatpush1.msra.mxu0 %v1551
    %1553 = vmatprep.subr.mxu0 0.0
    %v1554 = vand.u32 %v13, 4294901760
    %1555 = vmatpush1.msra.mxu0 %v1554
    %1556 = vmatprep.subr.mxu0 0.0
    %v1557 = vand.u32 %v12, 4294901760
    %1558 = vmatpush1.msra.mxu0 %v1557
    %1559 = vmatprep.subr.mxu0 0.0
    %1560 = vmatpush2.msra.mxu0 0.0
    %1561 = vmatprep.subr.mxu0 0.0
    %1562 = vmatpush2.msra.mxu0 0.0
    %1563 = vmatprep.subr.mxu0 0.0
    %1564 = vmatpush2.msra.mxu0 0.0
    %1565 = vmatprep.subr.mxu0 0.0
    %1566 = vmatpush2.msra.mxu0 0.0
    %1567 = vmatprep.subr.mxu0 0.0
    %1568 = vmatpush2.msra.mxu0 0.0
    %1569 = vmatprep.subr.mxu0 0.0
    %1570 = vmatpush2.msra.mxu0 0.0
    %1571 = vmatprep.subr.mxu0 0.0
    %1572 = vmatpush2.msra.mxu0 0.0
    %1573 = vmatprep.subr.mxu0 0.0
    %1574 = vmatpush2.msra.mxu0 0.0
    %1575 = vmatprep.subr.mxu0 0.0
    %1576 = vmatpush2.msra.mxu0 0.0
    %1577 = vmatprep.subr.mxu0 0.0
    %1578 = vmatpush2.msra.mxu0 0.0
    %1579 = vmatprep.subr.mxu0 0.0
    %1580 = vmatpush2.msra.mxu0 0.0
    %1581 = vmatprep.subr.mxu0 0.0
    %1582 = vmatpush2.msra.mxu0 0.0
    %1583 = vmatprep.subr.mxu0 0.0
    %1584 = vmatpush2.msra.mxu0 0.0
    %1585 = vmatprep.subr.mxu0 0.0
    %1586 = vmatpush2.msra.mxu0 0.0
    %1587 = vmatprep.subr.mxu0 0.0
    %1588 = vmatpush2.msra.mxu0 0.0
    %1589 = vmatprep.subr.mxu0 0.0
    %1590 = vmatpush2.msra.mxu0 0.0
    %1591 = vmatprep.mubr.f32.mxu0 0.0
    %v1592 = vand.u32 %v1085, 4294901760
    %1593 = vmatmul.mubr.f32.gmra.mxu0 %v1592
    %v1594 = vpop.f32.mrf.mxu0
    %v1595 = vadd.f32 %v1518, %v1594
    %v1596 = vpop.f32.mrf.mxu0
    %1597 = vdwg.mxu0
    %v1598 = vmul.f32 %v1595, 5.656854
    %v1599 = vld [vmem:[%s0 + $0x3] sm:$0x1]
    %v1600 = vlaneseq
    %v1601 = vshrl.u32 %v1600, 7
    %v1602 = vsub.s32 0, %v1601
    %v1603 = vrot.slane %v1599, %v1602
    %1605 = vbcast.lane.b32.xlu0 %v1603, 256
    %v1606 = vpop.permute.xlu0 %1605
    %vm1607 = vcmp.eq.s32.totalorder %v1606, %v27
    %v1608 = vsel %vm1607, 1, 0
    %v1609 = vcvt.s32.f32 %v1608
    %v1611 = vsel %vm31, %v1609, 0
    %1613 = vmatprep.subr.mxu0 0.0
    %1614 = vmatpush1.msra.mxu0 0.0
    %1615 = vmatprep.subr.mxu0 0.0
    %1616 = vmatpush1.msra.mxu0 0.0
    %1617 = vmatprep.subr.mxu0 0.0
    %1618 = vmatpush1.msra.mxu0 0.0
    %1619 = vmatprep.subr.mxu0 0.0
    %1620 = vmatpush1.msra.mxu0 0.0
    %1621 = vmatprep.subr.mxu0 0.0
    %1622 = vmatpush1.msra.mxu0 0.0
    %1623 = vmatprep.subr.mxu0 0.0
    %1624 = vmatpush1.msra.mxu0 0.0
    %1625 = vmatprep.subr.mxu0 0.0
    %1626 = vmatpush1.msra.mxu0 0.0
    %1627 = vmatprep.subr.mxu0 0.0
    %1628 = vmatpush1.msra.mxu0 0.0
    %1629 = vmatprep.subr.mxu0 0.0
    %1630 = vmatpush1.msra.mxu0 0.0
    %1631 = vmatprep.subr.mxu0 0.0
    %1632 = vmatpush1.msra.mxu0 0.0
    %1633 = vmatprep.subr.mxu0 0.0
    %v1634 = vand.u32 %v17, 4294901760
    %1635 = vmatpush1.msra.mxu0 %v1634
    %1636 = vmatprep.subr.mxu0 0.0
    %v1637 = vand.u32 %v16, 4294901760
    %1638 = vmatpush1.msra.mxu0 %v1637
    %1639 = vmatprep.subr.mxu0 0.0
    %v1640 = vand.u32 %v15, 4294901760
    %1641 = vmatpush1.msra.mxu0 %v1640
    %1642 = vmatprep.subr.mxu0 0.0
    %v1643 = vand.u32 %v14, 4294901760
    %1644 = vmatpush1.msra.mxu0 %v1643
    %1645 = vmatprep.subr.mxu0 0.0
    %v1646 = vand.u32 %v13, 4294901760
    %1647 = vmatpush1.msra.mxu0 %v1646
    %1648 = vmatprep.subr.mxu0 0.0
    %v1649 = vand.u32 %v12, 4294901760
    %1650 = vmatpush1.msra.mxu0 %v1649
    %1651 = vmatprep.subr.mxu0 0.0
    %1652 = vmatpush2.msra.mxu0 0.0
    %1653 = vmatprep.subr.mxu0 0.0
    %1654 = vmatpush2.msra.mxu0 0.0
    %1655 = vmatprep.subr.mxu0 0.0
    %1656 = vmatpush2.msra.mxu0 0.0
    %1657 = vmatprep.subr.mxu0 0.0
    %1658 = vmatpush2.msra.mxu0 0.0
    %1659 = vmatprep.subr.mxu0 0.0
    %1660 = vmatpush2.msra.mxu0 0.0
    %1661 = vmatprep.subr.mxu0 0.0
    %1662 = vmatpush2.msra.mxu0 0.0
    %1663 = vmatprep.subr.mxu0 0.0
    %1664 = vmatpush2.msra.mxu0 0.0
    %1665 = vmatprep.subr.mxu0 0.0
    %1666 = vmatpush2.msra.mxu0 0.0
    %1667 = vmatprep.subr.mxu0 0.0
    %1668 = vmatpush2.msra.mxu0 0.0
    %1669 = vmatprep.subr.mxu0 0.0
    %1670 = vmatpush2.msra.mxu0 0.0
    %1671 = vmatprep.subr.mxu0 0.0
    %1672 = vmatpush2.msra.mxu0 0.0
    %1673 = vmatprep.subr.mxu0 0.0
    %1674 = vmatpush2.msra.mxu0 0.0
    %1675 = vmatprep.subr.mxu0 0.0
    %1676 = vmatpush2.msra.mxu0 0.0
    %1677 = vmatprep.subr.mxu0 0.0
    %1678 = vmatpush2.msra.mxu0 0.0
    %1679 = vmatprep.subr.mxu0 0.0
    %1680 = vmatpush2.msra.mxu0 0.0
    %1681 = vmatprep.subr.mxu0 0.0
    %1682 = vmatpush2.msra.mxu0 0.0
    %1683 = vmatprep.mubr.f32.mxu0 0.0
    %v1684 = vand.u32 %v1611, 4294901760
    %v1685 = vsub.f32 %v1611, %v1684
    %v1686 = vand.u32 %v1685, 4294901760
    %v1687 = vsub.f32 %v1685, %v1686
    %v1688 = vand.u32 %v1687, 4294901760
    %1689 = vmatmul.mubr.f32.gmra.mxu0 %v1688
    %v1690 = vpop.f32.mrf.mxu0
    %v1691 = vadd.f32 0.0, %v1690
    %v1692 = vpop.f32.mrf.mxu0
    %1693 = vdwg.mxu0
    %1694 = vmatprep.subr.mxu0 0.0
    %1695 = vmatpush1.msra.mxu0 0.0
    %1696 = vmatprep.subr.mxu0 0.0
    %1697 = vmatpush1.msra.mxu0 0.0
    %1698 = vmatprep.subr.mxu0 0.0
    %1699 = vmatpush1.msra.mxu0 0.0
    %1700 = vmatprep.subr.mxu0 0.0
    %1701 = vmatpush1.msra.mxu0 0.0
    %1702 = vmatprep.subr.mxu0 0.0
    %1703 = vmatpush1.msra.mxu0 0.0
    %1704 = vmatprep.subr.mxu0 0.0
    %1705 = vmatpush1.msra.mxu0 0.0
    %1706 = vmatprep.subr.mxu0 0.0
    %1707 = vmatpush1.msra.mxu0 0.0
    %1708 = vmatprep.subr.mxu0 0.0
    %1709 = vmatpush1.msra.mxu0 0.0
    %1710 = vmatprep.subr.mxu0 0.0
    %1711 = vmatpush1.msra.mxu0 0.0
    %1712 = vmatprep.subr.mxu0 0.0
    %1713 = vmatpush1.msra.mxu0 0.0
    %1714 = vmatprep.subr.mxu0 0.0
    %v1715 = vand.u32 %v17, 4294901760
    %v1716 = vsub.f32 %v17, %v1715
    %v1717 = vand.u32 %v1716, 4294901760
    %v1718 = vsub.f32 %v1716, %v1717
    %v1719 = vand.u32 %v1718, 4294901760
    %1720 = vmatpush1.msra.mxu0 %v1719
    %1721 = vmatprep.subr.mxu0 0.0
    %v1722 = vand.u32 %v16, 4294901760
    %v1723 = vsub.f32 %v16, %v1722
    %v1724 = vand.u32 %v1723, 4294901760
    %v1725 = vsub.f32 %v1723, %v1724
    %v1726 = vand.u32 %v1725, 4294901760
    %1727 = vmatpush1.msra.mxu0 %v1726
    %1728 = vmatprep.subr.mxu0 0.0
    %v1729 = vand.u32 %v15, 4294901760
    %v1730 = vsub.f32 %v15, %v1729
    %v1731 = vand.u32 %v1730, 4294901760
    %v1732 = vsub.f32 %v1730, %v1731
    %v1733 = vand.u32 %v1732, 4294901760
    %1734 = vmatpush1.msra.mxu0 %v1733
    %1735 = vmatprep.subr.mxu0 0.0
    %v1736 = vand.u32 %v14, 4294901760
    %v1737 = vsub.f32 %v14, %v1736
    %v1738 = vand.u32 %v1737, 4294901760
    %v1739 = vsub.f32 %v1737, %v1738
    %v1740 = vand.u32 %v1739, 4294901760
    %1741 = vmatpush1.msra.mxu0 %v1740
    %1742 = vmatprep.subr.mxu0 0.0
    %v1743 = vand.u32 %v13, 4294901760
    %v1744 = vsub.f32 %v13, %v1743
    %v1745 = vand.u32 %v1744, 4294901760
    %v1746 = vsub.f32 %v1744, %v1745
    %v1747 = vand.u32 %v1746, 4294901760
    %1748 = vmatpush1.msra.mxu0 %v1747
    %1749 = vmatprep.subr.mxu0 0.0
    %v1750 = vand.u32 %v12, 4294901760
    %v1751 = vsub.f32 %v12, %v1750
    %v1752 = vand.u32 %v1751, 4294901760
    %v1753 = vsub.f32 %v1751, %v1752
    %v1754 = vand.u32 %v1753, 4294901760
    %1755 = vmatpush1.msra.mxu0 %v1754
    %1756 = vmatprep.subr.mxu0 0.0
    %1757 = vmatpush2.msra.mxu0 0.0
    %1758 = vmatprep.subr.mxu0 0.0
    %1759 = vmatpush2.msra.mxu0 0.0
    %1760 = vmatprep.subr.mxu0 0.0
    %1761 = vmatpush2.msra.mxu0 0.0
    %1762 = vmatprep.subr.mxu0 0.0
    %1763 = vmatpush2.msra.mxu0 0.0
    %1764 = vmatprep.subr.mxu0 0.0
    %1765 = vmatpush2.msra.mxu0 0.0
    %1766 = vmatprep.subr.mxu0 0.0
    %1767 = vmatpush2.msra.mxu0 0.0
    %1768 = vmatprep.subr.mxu0 0.0
    %1769 = vmatpush2.msra.mxu0 0.0
    %1770 = vmatprep.subr.mxu0 0.0
    %1771 = vmatpush2.msra.mxu0 0.0
    %1772 = vmatprep.subr.mxu0 0.0
    %1773 = vmatpush2.msra.mxu0 0.0
    %1774 = vmatprep.subr.mxu0 0.0
    %1775 = vmatpush2.msra.mxu0 0.0
    %1776 = vmatprep.subr.mxu0 0.0
    %1777 = vmatpush2.msra.mxu0 0.0
    %1778 = vmatprep.subr.mxu0 0.0
    %1779 = vmatpush2.msra.mxu0 0.0
    %1780 = vmatprep.subr.mxu0 0.0
    %1781 = vmatpush2.msra.mxu0 0.0
    %1782 = vmatprep.subr.mxu0 0.0
    %1783 = vmatpush2.msra.mxu0 0.0
    %1784 = vmatprep.subr.mxu0 0.0
    %1785 = vmatpush2.msra.mxu0 0.0
    %1786 = vmatprep.subr.mxu0 0.0
    %1787 = vmatpush2.msra.mxu0 0.0
    %1788 = vmatprep.mubr.f32.mxu0 0.0
    %v1789 = vand.u32 %v1611, 4294901760
    %1790 = vmatmul.mubr.f32.gmra.mxu0 %v1789
    %v1791 = vpop.f32.mrf.mxu0
    %v1792 = vadd.f32 %v1691, %v1791
    %v1793 = vpop.f32.mrf.mxu0
    %1794 = vdwg.mxu0
    %1795 = vmatprep.subr.mxu0 0.0
    %1796 = vmatpush1.msra.mxu0 0.0
    %1797 = vmatprep.subr.mxu0 0.0
    %1798 = vmatpush1.msra.mxu0 0.0
    %1799 = vmatprep.subr.mxu0 0.0
    %1800 = vmatpush1.msra.mxu0 0.0
    %1801 = vmatprep.subr.mxu0 0.0
    %1802 = vmatpush1.msra.mxu0 0.0
    %1803 = vmatprep.subr.mxu0 0.0
    %1804 = vmatpush1.msra.mxu0 0.0
    %1805 = vmatprep.subr.mxu0 0.0
    %1806 = vmatpush1.msra.mxu0 0.0
    %1807 = vmatprep.subr.mxu0 0.0
    %1808 = vmatpush1.msra.mxu0 0.0
    %1809 = vmatprep.subr.mxu0 0.0
    %1810 = vmatpush1.msra.mxu0 0.0
    %1811 = vmatprep.subr.mxu0 0.0
    %1812 = vmatpush1.msra.mxu0 0.0
    %1813 = vmatprep.subr.mxu0 0.0
    %1814 = vmatpush1.msra.mxu0 0.0
    %1815 = vmatprep.subr.mxu0 0.0
    %v1816 = vand.u32 %v17, 4294901760
    %v1817 = vsub.f32 %v17, %v1816
    %1818 = vmatpush1.msra.mxu0 %v1817
    %1819 = vmatprep.subr.mxu0 0.0
    %v1820 = vand.u32 %v16, 4294901760
    %v1821 = vsub.f32 %v16, %v1820
    %1822 = vmatpush1.msra.mxu0 %v1821
    %1823 = vmatprep.subr.mxu0 0.0
    %v1824 = vand.u32 %v15, 4294901760
    %v1825 = vsub.f32 %v15, %v1824
    %1826 = vmatpush1.msra.mxu0 %v1825
    %1827 = vmatprep.subr.mxu0 0.0
    %v1828 = vand.u32 %v14, 4294901760
    %v1829 = vsub.f32 %v14, %v1828
    %1830 = vmatpush1.msra.mxu0 %v1829
    %1831 = vmatprep.subr.mxu0 0.0
    %v1832 = vand.u32 %v13, 4294901760
    %v1833 = vsub.f32 %v13, %v1832
    %1834 = vmatpush1.msra.mxu0 %v1833
    %1835 = vmatprep.subr.mxu0 0.0
    %v1836 = vand.u32 %v12, 4294901760
    %v1837 = vsub.f32 %v12, %v1836
    %1838 = vmatpush1.msra.mxu0 %v1837
    %1839 = vmatprep.subr.mxu0 0.0
    %1840 = vmatpush2.msra.mxu0 0.0
    %1841 = vmatprep.subr.mxu0 0.0
    %1842 = vmatpush2.msra.mxu0 0.0
    %1843 = vmatprep.subr.mxu0 0.0
    %1844 = vmatpush2.msra.mxu0 0.0
    %1845 = vmatprep.subr.mxu0 0.0
    %1846 = vmatpush2.msra.mxu0 0.0
    %1847 = vmatprep.subr.mxu0 0.0
    %1848 = vmatpush2.msra.mxu0 0.0
    %1849 = vmatprep.subr.mxu0 0.0
    %1850 = vmatpush2.msra.mxu0 0.0
    %1851 = vmatprep.subr.mxu0 0.0
    %1852 = vmatpush2.msra.mxu0 0.0
    %1853 = vmatprep.subr.mxu0 0.0
    %1854 = vmatpush2.msra.mxu0 0.0
    %1855 = vmatprep.subr.mxu0 0.0
    %1856 = vmatpush2.msra.mxu0 0.0
    %1857 = vmatprep.subr.mxu0 0.0
    %1858 = vmatpush2.msra.mxu0 0.0
    %1859 = vmatprep.subr.mxu0 0.0
    %1860 = vmatpush2.msra.mxu0 0.0
    %1861 = vmatprep.subr.mxu0 0.0
    %1862 = vmatpush2.msra.mxu0 0.0
    %1863 = vmatprep.subr.mxu0 0.0
    %1864 = vmatpush2.msra.mxu0 0.0
    %1865 = vmatprep.subr.mxu0 0.0
    %1866 = vmatpush2.msra.mxu0 0.0
    %1867 = vmatprep.subr.mxu0 0.0
    %1868 = vmatpush2.msra.mxu0 0.0
    %1869 = vmatprep.subr.mxu0 0.0
    %1870 = vmatpush2.msra.mxu0 0.0
    %1871 = vmatprep.mubr.f32.mxu0 0.0
    %v1872 = vand.u32 %v1611, 4294901760
    %v1873 = vsub.f32 %v1611, %v1872
    %1874 = vmatmul.mubr.f32.gmra.mxu0 %v1873
    %v1875 = vpop.f32.mrf.mxu0
    %v1876 = vadd.f32 %v1792, %v1875
    %v1877 = vpop.f32.mrf.mxu0
    %1878 = vdwg.mxu0
    %1879 = vmatprep.subr.mxu0 0.0
    %1880 = vmatpush1.msra.mxu0 0.0
    %1881 = vmatprep.subr.mxu0 0.0
    %1882 = vmatpush1.msra.mxu0 0.0
    %1883 = vmatprep.subr.mxu0 0.0
    %1884 = vmatpush1.msra.mxu0 0.0
    %1885 = vmatprep.subr.mxu0 0.0
    %1886 = vmatpush1.msra.mxu0 0.0
    %1887 = vmatprep.subr.mxu0 0.0
    %1888 = vmatpush1.msra.mxu0 0.0
    %1889 = vmatprep.subr.mxu0 0.0
    %1890 = vmatpush1.msra.mxu0 0.0
    %1891 = vmatprep.subr.mxu0 0.0
    %1892 = vmatpush1.msra.mxu0 0.0
    %1893 = vmatprep.subr.mxu0 0.0
    %1894 = vmatpush1.msra.mxu0 0.0
    %1895 = vmatprep.subr.mxu0 0.0
    %1896 = vmatpush1.msra.mxu0 0.0
    %1897 = vmatprep.subr.mxu0 0.0
    %1898 = vmatpush1.msra.mxu0 0.0
    %1899 = vmatprep.subr.mxu0 0.0
    %v1900 = vand.u32 %v17, 4294901760
    %1901 = vmatpush1.msra.mxu0 %v1900
    %1902 = vmatprep.subr.mxu0 0.0
    %v1903 = vand.u32 %v16, 4294901760
    %1904 = vmatpush1.msra.mxu0 %v1903
    %1905 = vmatprep.subr.mxu0 0.0
    %v1906 = vand.u32 %v15, 4294901760
    %1907 = vmatpush1.msra.mxu0 %v1906
    %1908 = vmatprep.subr.mxu0 0.0
    %v1909 = vand.u32 %v14, 4294901760
    %1910 = vmatpush1.msra.mxu0 %v1909
    %1911 = vmatprep.subr.mxu0 0.0
    %v1912 = vand.u32 %v13, 4294901760
    %1913 = vmatpush1.msra.mxu0 %v1912
    %1914 = vmatprep.subr.mxu0 0.0
    %v1915 = vand.u32 %v12, 4294901760
    %1916 = vmatpush1.msra.mxu0 %v1915
    %1917 = vmatprep.subr.mxu0 0.0
    %1918 = vmatpush2.msra.mxu0 0.0
    %1919 = vmatprep.subr.mxu0 0.0
    %1920 = vmatpush2.msra.mxu0 0.0
    %1921 = vmatprep.subr.mxu0 0.0
    %1922 = vmatpush2.msra.mxu0 0.0
    %1923 = vmatprep.subr.mxu0 0.0
    %1924 = vmatpush2.msra.mxu0 0.0
    %1925 = vmatprep.subr.mxu0 0.0
    %1926 = vmatpush2.msra.mxu0 0.0
    %1927 = vmatprep.subr.mxu0 0.0
    %1928 = vmatpush2.msra.mxu0 0.0
    %1929 = vmatprep.subr.mxu0 0.0
    %1930 = vmatpush2.msra.mxu0 0.0
    %1931 = vmatprep.subr.mxu0 0.0
    %1932 = vmatpush2.msra.mxu0 0.0
    %1933 = vmatprep.subr.mxu0 0.0
    %1934 = vmatpush2.msra.mxu0 0.0
    %1935 = vmatprep.subr.mxu0 0.0
    %1936 = vmatpush2.msra.mxu0 0.0
    %1937 = vmatprep.subr.mxu0 0.0
    %1938 = vmatpush2.msra.mxu0 0.0
    %1939 = vmatprep.subr.mxu0 0.0
    %1940 = vmatpush2.msra.mxu0 0.0
    %1941 = vmatprep.subr.mxu0 0.0
    %1942 = vmatpush2.msra.mxu0 0.0
    %1943 = vmatprep.subr.mxu0 0.0
    %1944 = vmatpush2.msra.mxu0 0.0
    %1945 = vmatprep.subr.mxu0 0.0
    %1946 = vmatpush2.msra.mxu0 0.0
    %1947 = vmatprep.subr.mxu0 0.0
    %1948 = vmatpush2.msra.mxu0 0.0
    %1949 = vmatprep.mubr.f32.mxu0 0.0
    %v1950 = vand.u32 %v1611, 4294901760
    %v1951 = vsub.f32 %v1611, %v1950
    %v1952 = vand.u32 %v1951, 4294901760
    %1953 = vmatmul.mubr.f32.gmra.mxu0 %v1952
    %v1954 = vpop.f32.mrf.mxu0
    %v1955 = vadd.f32 %v1876, %v1954
    %v1956 = vpop.f32.mrf.mxu0
    %1957 = vdwg.mxu0
    %1958 = vmatprep.subr.mxu0 0.0
    %1959 = vmatpush1.msra.mxu0 0.0
    %1960 = vmatprep.subr.mxu0 0.0
    %1961 = vmatpush1.msra.mxu0 0.0
    %1962 = vmatprep.subr.mxu0 0.0
    %1963 = vmatpush1.msra.mxu0 0.0
    %1964 = vmatprep.subr.mxu0 0.0
    %1965 = vmatpush1.msra.mxu0 0.0
    %1966 = vmatprep.subr.mxu0 0.0
    %1967 = vmatpush1.msra.mxu0 0.0
    %1968 = vmatprep.subr.mxu0 0.0
    %1969 = vmatpush1.msra.mxu0 0.0
    %1970 = vmatprep.subr.mxu0 0.0
    %1971 = vmatpush1.msra.mxu0 0.0
    %1972 = vmatprep.subr.mxu0 0.0
    %1973 = vmatpush1.msra.mxu0 0.0
    %1974 = vmatprep.subr.mxu0 0.0
    %1975 = vmatpush1.msra.mxu0 0.0
    %1976 = vmatprep.subr.mxu0 0.0
    %1977 = vmatpush1.msra.mxu0 0.0
    %1978 = vmatprep.subr.mxu0 0.0
    %v1979 = vand.u32 %v17, 4294901760
    %v1980 = vsub.f32 %v17, %v1979
    %v1981 = vand.u32 %v1980, 4294901760
    %1982 = vmatpush1.msra.mxu0 %v1981
    %1983 = vmatprep.subr.mxu0 0.0
    %v1984 = vand.u32 %v16, 4294901760
    %v1985 = vsub.f32 %v16, %v1984
    %v1986 = vand.u32 %v1985, 4294901760
    %1987 = vmatpush1.msra.mxu0 %v1986
    %1988 = vmatprep.subr.mxu0 0.0
    %v1989 = vand.u32 %v15, 4294901760
    %v1990 = vsub.f32 %v15, %v1989
    %v1991 = vand.u32 %v1990, 4294901760
    %1992 = vmatpush1.msra.mxu0 %v1991
    %1993 = vmatprep.subr.mxu0 0.0
    %v1994 = vand.u32 %v14, 4294901760
    %v1995 = vsub.f32 %v14, %v1994
    %v1996 = vand.u32 %v1995, 4294901760
    %1997 = vmatpush1.msra.mxu0 %v1996
    %1998 = vmatprep.subr.mxu0 0.0
    %v1999 = vand.u32 %v13, 4294901760
    %v2000 = vsub.f32 %v13, %v1999
    %v2001 = vand.u32 %v2000, 4294901760
    %2002 = vmatpush1.msra.mxu0 %v2001
    %2003 = vmatprep.subr.mxu0 0.0
    %v2004 = vand.u32 %v12, 4294901760
    %v2005 = vsub.f32 %v12, %v2004
    %v2006 = vand.u32 %v2005, 4294901760
    %2007 = vmatpush1.msra.mxu0 %v2006
    %2008 = vmatprep.subr.mxu0 0.0
    %2009 = vmatpush2.msra.mxu0 0.0
    %2010 = vmatprep.subr.mxu0 0.0
    %2011 = vmatpush2.msra.mxu0 0.0
    %2012 = vmatprep.subr.mxu0 0.0
    %2013 = vmatpush2.msra.mxu0 0.0
    %2014 = vmatprep.subr.mxu0 0.0
    %2015 = vmatpush2.msra.mxu0 0.0
    %2016 = vmatprep.subr.mxu0 0.0
    %2017 = vmatpush2.msra.mxu0 0.0
    %2018 = vmatprep.subr.mxu0 0.0
    %2019 = vmatpush2.msra.mxu0 0.0
    %2020 = vmatprep.subr.mxu0 0.0
    %2021 = vmatpush2.msra.mxu0 0.0
    %2022 = vmatprep.subr.mxu0 0.0
    %2023 = vmatpush2.msra.mxu0 0.0
    %2024 = vmatprep.subr.mxu0 0.0
    %2025 = vmatpush2.msra.mxu0 0.0
    %2026 = vmatprep.subr.mxu0 0.0
    %2027 = vmatpush2.msra.mxu0 0.0
    %2028 = vmatprep.subr.mxu0 0.0
    %2029 = vmatpush2.msra.mxu0 0.0
    %2030 = vmatprep.subr.mxu0 0.0
    %2031 = vmatpush2.msra.mxu0 0.0
    %2032 = vmatprep.subr.mxu0 0.0
    %2033 = vmatpush2.msra.mxu0 0.0
    %2034 = vmatprep.subr.mxu0 0.0
    %2035 = vmatpush2.msra.mxu0 0.0
    %2036 = vmatprep.subr.mxu0 0.0
    %2037 = vmatpush2.msra.mxu0 0.0
    %2038 = vmatprep.subr.mxu0 0.0
    %2039 = vmatpush2.msra.mxu0 0.0
    %2040 = vmatprep.mubr.f32.mxu0 0.0
    %v2041 = vand.u32 %v1611, 4294901760
    %2042 = vmatmul.mubr.f32.gmra.mxu0 %v2041
    %v2043 = vpop.f32.mrf.mxu0
    %v2044 = vadd.f32 %v1955, %v2043
    %v2045 = vpop.f32.mrf.mxu0
    %2046 = vdwg.mxu0
    %2047 = vmatprep.subr.mxu0 0.0
    %2048 = vmatpush1.msra.mxu0 0.0
    %2049 = vmatprep.subr.mxu0 0.0
    %2050 = vmatpush1.msra.mxu0 0.0
    %2051 = vmatprep.subr.mxu0 0.0
    %2052 = vmatpush1.msra.mxu0 0.0
    %2053 = vmatprep.subr.mxu0 0.0
    %2054 = vmatpush1.msra.mxu0 0.0
    %2055 = vmatprep.subr.mxu0 0.0
    %2056 = vmatpush1.msra.mxu0 0.0
    %2057 = vmatprep.subr.mxu0 0.0
    %2058 = vmatpush1.msra.mxu0 0.0
    %2059 = vmatprep.subr.mxu0 0.0
    %2060 = vmatpush1.msra.mxu0 0.0
    %2061 = vmatprep.subr.mxu0 0.0
    %2062 = vmatpush1.msra.mxu0 0.0
    %2063 = vmatprep.subr.mxu0 0.0
    %2064 = vmatpush1.msra.mxu0 0.0
    %2065 = vmatprep.subr.mxu0 0.0
    %2066 = vmatpush1.msra.mxu0 0.0
    %2067 = vmatprep.subr.mxu0 0.0
    %v2068 = vand.u32 %v17, 4294901760
    %2069 = vmatpush1.msra.mxu0 %v2068
    %2070 = vmatprep.subr.mxu0 0.0
    %v2071 = vand.u32 %v16, 4294901760
    %2072 = vmatpush1.msra.mxu0 %v2071
    %2073 = vmatprep.subr.mxu0 0.0
    %v2074 = vand.u32 %v15, 4294901760
    %2075 = vmatpush1.msra.mxu0 %v2074
    %2076 = vmatprep.subr.mxu0 0.0
    %v2077 = vand.u32 %v14, 4294901760
    %2078 = vmatpush1.msra.mxu0 %v2077
    %2079 = vmatprep.subr.mxu0 0.0
    %v2080 = vand.u32 %v13, 4294901760
    %2081 = vmatpush1.msra.mxu0 %v2080
    %2082 = vmatprep.subr.mxu0 0.0
    %v2083 = vand.u32 %v12, 4294901760
    %2084 = vmatpush1.msra.mxu0 %v2083
    %2085 = vmatprep.subr.mxu0 0.0
    %2086 = vmatpush2.msra.mxu0 0.0
    %2087 = vmatprep.subr.mxu0 0.0
    %2088 = vmatpush2.msra.mxu0 0.0
    %2089 = vmatprep.subr.mxu0 0.0
    %2090 = vmatpush2.msra.mxu0 0.0
    %2091 = vmatprep.subr.mxu0 0.0
    %2092 = vmatpush2.msra.mxu0 0.0
    %2093 = vmatprep.subr.mxu0 0.0
    %2094 = vmatpush2.msra.mxu0 0.0
    %2095 = vmatprep.subr.mxu0 0.0
    %2096 = vmatpush2.msra.mxu0 0.0
    %2097 = vmatprep.subr.mxu0 0.0
    %2098 = vmatpush2.msra.mxu0 0.0
    %2099 = vmatprep.subr.mxu0 0.0
    %2100 = vmatpush2.msra.mxu0 0.0
    %2101 = vmatprep.subr.mxu0 0.0
    %2102 = vmatpush2.msra.mxu0 0.0
    %2103 = vmatprep.subr.mxu0 0.0
    %2104 = vmatpush2.msra.mxu0 0.0
    %2105 = vmatprep.subr.mxu0 0.0
    %2106 = vmatpush2.msra.mxu0 0.0
    %2107 = vmatprep.subr.mxu0 0.0
    %2108 = vmatpush2.msra.mxu0 0.0
    %2109 = vmatprep.subr.mxu0 0.0
    %2110 = vmatpush2.msra.mxu0 0.0
    %2111 = vmatprep.subr.mxu0 0.0
    %2112 = vmatpush2.msra.mxu0 0.0
    %2113 = vmatprep.subr.mxu0 0.0
    %2114 = vmatpush2.msra.mxu0 0.0
    %2115 = vmatprep.subr.mxu0 0.0
    %2116 = vmatpush2.msra.mxu0 0.0
    %2117 = vmatprep.mubr.f32.mxu0 0.0
    %v2118 = vand.u32 %v1611, 4294901760
    %2119 = vmatmul.mubr.f32.gmra.mxu0 %v2118
    %v2120 = vpop.f32.mrf.mxu0
    %v2121 = vadd.f32 %v2044, %v2120
    %v2122 = vpop.f32.mrf.mxu0
    %2123 = vdwg.mxu0
    %v2124 = vmul.f32 %v2121, 5.656854
    %2126 = vrot.lane.b32.xlu0 %v1072, 32
    %v2127 = vpop.permute.xlu0 %2126
    %2130 = vrot.lane.b32.xlu0 %v1598, 64
    %v2131 = vpop.permute.xlu0 %2130
    %2134 = vrot.lane.b32.xlu0 %v2124, 96
    %v2135 = vpop.permute.xlu0 %2134
    %vm2137 = vcmask 261120
    %v2138 = vsel %vm2137, %v546, %v2127
    %vm2139 = vcmask 523264
    %v2140 = vsel %vm2139, %v2138, %v2131
    %vm2141 = vcmask 785408
    %v2142 = vsel %vm2141, %v2140, %v2135
    %2143 = vst [vmem:[#allocation2] sm:$0xff] %v2142
    // Predicated region
    $region10: #{tpu_custom_call.1} parent=1 // pred_check
      _
    $region11: #{tpu_custom_call.1} parent=1 // pred_check_branch
      %2145 = sbr.rel (0) target = $region13
    $region12: #{tpu_custom_call.1} parent=1 // pred_region
      %s2147 = ssub.s32 128, 128
      %2148 = vsyncadd [#allocation3], %s2147
      %s2150 = sshll.u32 [#allocation2], 4
      %s2151 = int_to_ptr.vmem [resolvable:$true] %s2150
      %2153 = dma.vmem_to_hbm [thread:$0]  %s2151, 128, %s2, [#allocation3]
    $region13: #{tpu_custom_call.1} parent=1 // pred_fallthru
      _
    // Predicated region
    $region14: #{tpu_custom_call.1} parent=1 // pred_check
      _
    $region15: #{tpu_custom_call.1} parent=1 // pred_check_branch
      %2155 = sbr.rel (0) target = $region17
    $region16: #{tpu_custom_call.1} parent=1 // pred_region
      %2156 = dma.done [#allocation3], 128
    $region17: #{tpu_custom_call.1} parent=1 // pred_fallthru
      _
    %2157 = vsyncpa [#allocation3], 1

</llo_original>
